<compile_context>
chip_gen: v7x
topology: tpu7x:2x2x1
jax: 0.10.0
libtpu: 0.0.40
codegen_flags: <defaults>
</compile_context>

<pallas_src>
import jax
import jax.numpy as jnp
from jax.experimental import pallas as pl
from jax.experimental.pallas import tpu as pltpu

# ------------------------- synthetic env / mpm_args config -------------------------
DIM          = 128                     # mpm_args.dim
D3           = 3 * DIM
PUB_OBS_SIZE = 72                      # env_bldr.pub_obs_size
BOARD_START  = 16                      # env_bldr.obs_board_idxs[0]
N_BOARD_OBS  = 24                      # len(obs_board_idxs) == obs_size_board
BOARD_STOP   = BOARD_START + N_BOARD_OBS
HIST_SIZE    = PUB_OBS_SIZE - N_BOARD_OBS     # 48
RANGE_SIZE   = 1326                    # 52 choose 2 hole-card combos
BATCH        = 16
LN_EPS       = 1e-5
MAX_TILE_B   = 512                     # per-grid-step batch tile cap (perf review)

# ---- row offsets inside the 128-wide weight slab (all 128-row aligned) ----
OFF_WC3   = 0                               # cards_fc_3        [384,128]
OFF_WH2   = OFF_WC3 + D3                    # history_2         [128,128]   (384)
OFF_WCB1C = OFF_WH2 + DIM                   # comb_1, card half [128,128]   (512)
OFF_WCB1H = OFF_WCB1C + DIM                 # comb_1, hist half [128,128]   (640)
OFF_WCB2  = OFF_WCB1H + DIM                 # comb_2            [128,128]   (768)
WB_ROWS   = OFF_WCB2 + DIM                  # 896


# ------------------------------- Pallas kernel --------------------------------------
def _mpm_kernel(pub_ref, card_ref, wa_ref, wb_ref, wp_ref, b_ref, out_ref):
    relu = lambda x: jnp.maximum(x, 0.0)
    # bf16 MXU matmul, f32 accumulation
    mm = lambda x, w: jnp.dot(x.astype(jnp.bfloat16), w,
                              preferred_element_type=jnp.float32)

    pub_bf = pub_ref[...]                      # [TB, 128] bf16 (pre-padded / pre-cast)

    # ---- biases / LN params (f32, one small slab, static slices) ----
    bc1  = b_ref[0:1, :]                       # (1, 384)
    bc2  = b_ref[1:2, :]
    bc3  = b_ref[2:3, 0:DIM]
    bh1  = b_ref[2:3, DIM:2 * DIM]
    bh2  = b_ref[2:3, 2 * DIM:3 * DIM]
    bcb1 = b_ref[3:4, 0:DIM]
    bcb2 = b_ref[3:4, DIM:2 * DIM]
    ln_g = b_ref[3:4, 2 * DIM:3 * DIM]
    ln_b = b_ref[4:5, 0:DIM]

    # ---- fused pub projections: ONE aligned K=128, N=256 matmul ----
    #   lanes   0..127 : history_1(hist_obs)   (pre-bias)
    #   lanes 128..255 : board_projection(board_obs)
    pp = jnp.dot(pub_bf, wp_ref[...], preferred_element_type=jnp.float32)   # [TB, 256]
    h_pre      = pp[:, 0:DIM]
    board_proj = pp[:, DIM:2 * DIM]

    # ---- card embedding = gathered (hole-card sums + board bias) + board projection ----
    card = card_ref[...] + board_proj

    # ---- cards branch ----
    c = relu(mm(card, wa_ref[0:DIM, :]) + bc1)                 # [TB, 384]
    c = relu(mm(c, wa_ref[DIM:DIM + D3, :]) + bc2 + c)         # residual
    c = relu(mm(c, wb_ref[OFF_WC3:OFF_WC3 + D3, :]) + bc3)     # [TB, 128]

    # ---- history branch ----
    h = relu(h_pre + bh1)
    h = relu(mm(h, wb_ref[OFF_WH2:OFF_WH2 + DIM, :]) + bh2 + h)

    # ---- combine without lane-concat: comb_1 weight split into two K=128 matmuls ----
    y = relu(mm(c, wb_ref[OFF_WCB1C:OFF_WCB1C + DIM, :])
             + mm(h, wb_ref[OFF_WCB1H:OFF_WCB1H + DIM, :]) + bcb1)
    y = relu(mm(y, wb_ref[OFF_WCB2:OFF_WCB2 + DIM, :]) + bcb2 + y)

    # ---- LayerNorm (biased variance, eps inside sqrt) ----
    mean = jnp.mean(y, axis=-1, keepdims=True)
    var = jnp.mean(jnp.square(y - mean), axis=-1, keepdims=True)
    out_ref[...] = (y - mean) * jax.lax.rsqrt(var + LN_EPS) * ln_g + ln_b


def low_main_poker_pallas(pub_pad, card_base, w_a, w_b, w_pub, biases):
    B = pub_pad.shape[0]
    tile_b = B if B <= MAX_TILE_B else MAX_TILE_B
    n_blk = pl.cdiv(B, tile_b)
    b_pad = n_blk * tile_b
    if b_pad != B:
        # zero-pad the batch so no uninitialized rows flow through matmuls / LayerNorm
        pub_pad = jnp.pad(pub_pad, ((0, b_pad - B), (0, 0)))
        card_base = jnp.pad(card_base, ((0, b_pad - B), (0, 0)))

    row_spec = lambda feat: pl.BlockSpec((tile_b, feat), lambda i: (i, 0))
    full_spec = lambda a: pl.BlockSpec(a.shape, lambda i: (0, 0))   # VMEM-resident slab

    out = pl.pallas_call(
        _mpm_kernel,
        out_shape=jax.ShapeDtypeStruct((b_pad, DIM), jnp.float32),
        grid_spec=pltpu.PrefetchScalarGridSpec(
            num_scalar_prefetch=0,
            grid=(n_blk,),
            in_specs=[row_spec(DIM), row_spec(DIM),
                      full_spec(w_a), full_spec(w_b), full_spec(w_pub),
                      full_spec(biases)],
            out_specs=row_spec(DIM),
        ),
        compiler_params=pltpu.CompilerParams(dimension_semantics=("parallel",)),
    )(pub_pad, card_base, w_a, w_b, w_pub, biases)
    return out[:B]


# ------------------------------- param packing (one-time) ---------------------------
def pack_params(p):
    f32 = jnp.float32

    # Fused pub-projection slab [128, 256]:
    #   cols   0..127 : history_1 weights placed at their pub positions (board rows = 0)
    #   cols 128..255 : board projection weights at the board rows (other rows = 0)
    #   rows  72..127 : zero (pub is zero-padded to 128 lanes in the wrapper)
    w_pub = jnp.zeros((DIM, 2 * DIM), f32)
    w_pub = w_pub.at[:BOARD_START, :DIM].set(p["wh1"][:BOARD_START])
    w_pub = w_pub.at[BOARD_STOP:PUB_OBS_SIZE, :DIM].set(p["wh1"][BOARD_START:])
    w_pub = w_pub.at[BOARD_START:BOARD_STOP, DIM:].set(p["board_w"])
    w_pub = w_pub.astype(jnp.bfloat16)                                        # [128, 256]

    w_b = jnp.concatenate(
        [p["wc3"], p["wh2"], p["wcb1"][:DIM], p["wcb1"][DIM:], p["wcb2"]],
        axis=0).astype(jnp.bfloat16)                                          # [896, 128]
    w_a = jnp.concatenate([p["wc1"], p["wc2"]], axis=0).astype(jnp.bfloat16)  # [512, 384]

    row3 = lambda a, b, c: jnp.concatenate([a, b, c], axis=-1)                # 3 x (1,128)
    biases = jnp.concatenate(
        [p["bc1"], p["bc2"],
         row3(p["bc3"], p["bh1"], p["bh2"]),
         row3(p["bcb1"], p["bcb2"], p["ln_g"]),
         row3(p["ln_b"], jnp.zeros((1, DIM), f32), jnp.zeros((1, DIM), f32)),
         jnp.zeros((3, D3), f32)], axis=0)                                    # [8, 384] f32

    # range_idx -> (emb(c1)+emb(c2)+board_bias) table, precomputed once
    hole = p["hole_lut"]
    emb = lambda c: p["card_emb"][c] + p["rank_emb"][c // 4] + p["suit_emb"][c % 4]
    range_tab = emb(hole[:, 0]) + emb(hole[:, 1]) + p["board_b"]              # [1326, 128]

    return {"w_a": w_a, "w_b": w_b, "w_pub": w_pub, "biases": biases,
            "range_tab": range_tab}


# ------------------------------- forward ---------------------------------------------
def forward(pub_obses, range_idxs, option_idxs, packed):
    # option_idxs is unused in the reference forward (embed_option never applied).
    del option_idxs
    B = pub_obses.shape[0]
    # zero-pad the 72-wide observation to 128 lanes and cast to bf16 ONCE in the wrapper
    pub_pad = jnp.zeros((B, DIM), jnp.bfloat16)
    pub_pad = pub_pad.at[:, :PUB_OBS_SIZE].set(pub_obses.astype(jnp.bfloat16))
    card_base = jnp.take(packed["range_tab"], range_idxs, axis=0)   # single tiny gather
    return low_main_poker_pallas(pub_pad, card_base, packed["w_a"], packed["w_b"],
                                 packed["w_pub"], packed["biases"])


# ------------------------------- pure-JAX references ---------------------------------
def _card_embedding(pub, range_idxs, p):
    # TODO(synk): CardEmbedding source was not included with the reference module;
    # approximated as sum of (card + rank + suit) embeddings of the two hole cards
    # plus a linear projection of the board slice.  out_size == DIM.
    hole = p["hole_lut"][range_idxs]
    emb = lambda c: p["card_emb"][c] + p["rank_emb"][c // 4] + p["suit_emb"][c % 4]
    board = pub[:, BOARD_START:BOARD_STOP]
    return emb(hole[:, 0]) + emb(hole[:, 1]), board


def _reference(pub_obses, range_idxs, p, mm):
    pub = pub_obses.astype(jnp.float32)
    hist = jnp.concatenate([pub[:, :BOARD_START], pub[:, BOARD_STOP:]], axis=-1)
    emb_sum, board = _card_embedding(pub, range_idxs, p)
    card = emb_sum + mm(board, p["board_w"]) + p["board_b"]
    relu = lambda x: jnp.maximum(x, 0.0)
    c = relu(mm(card, p["wc1"]) + p["bc1"])
    c = relu(mm(c, p["wc2"]) + p["bc2"] + c)
    c = relu(mm(c, p["wc3"]) + p["bc3"])
    h = relu(mm(hist, p["wh1"]) + p["bh1"])
    h = relu(mm(h, p["wh2"]) + p["bh2"] + h)
    y = relu(mm(jnp.concatenate([c, h], -1), p["wcb1"]) + p["bcb1"])
    y = relu(mm(y, p["wcb2"]) + p["bcb2"] + y)
    mean = y.mean(-1, keepdims=True)
    var = jnp.square(y - mean).mean(-1, keepdims=True)
    return (y - mean) / jnp.sqrt(var + LN_EPS) * p["ln_g"] + p["ln_b"]


def reference_mixed(pub_obses, range_idxs, p):
    # same numerics as the kernel: bf16 matmul operands, f32 accumulation / elementwise
    mm = lambda x, w: jnp.dot(x.astype(jnp.bfloat16), w.astype(jnp.bfloat16),
                              preferred_element_type=jnp.float32)
    return _reference(pub_obses, range_idxs, p, mm)


def reference_f32(pub_obses, range_idxs, p):
    return _reference(pub_obses, range_idxs, p, lambda x, w: x @ w)


# ------------------------------- deterministic params --------------------------------
def init_params(key):
    def linear(key, fan_in, fan_out):
        kw, kb = jax.random.split(key)
        bound = 1.0 / jnp.sqrt(fan_in)
        w = jax.random.uniform(kw, (fan_in, fan_out), jnp.float32, -bound, bound)
        b = jax.random.uniform(kb, (1, fan_out), jnp.float32, -bound, bound)
        return w, b

    ks = jax.random.split(key, 16)
    p = {}
    p["wc1"], p["bc1"] = linear(ks[0], DIM, D3)
    p["wc2"], p["bc2"] = linear(ks[1], D3, D3)
    p["wc3"], p["bc3"] = linear(ks[2], D3, DIM)
    p["wh1"], p["bh1"] = linear(ks[3], HIST_SIZE, DIM)
    p["wh2"], p["bh2"] = linear(ks[4], DIM, DIM)
    p["wcb1"], p["bcb1"] = linear(ks[5], 2 * DIM, DIM)
    p["wcb2"], p["bcb2"] = linear(ks[6], DIM, DIM)
    p["ln_g"] = jnp.ones((1, DIM), jnp.float32)
    p["ln_b"] = jnp.zeros((1, DIM), jnp.float32)
    # card-embedding tables
    p["card_emb"] = 0.1 * jax.random.normal(ks[7], (52, DIM), jnp.float32)
    p["rank_emb"] = 0.1 * jax.random.normal(ks[8], (13, DIM), jnp.float32)
    p["suit_emb"] = 0.1 * jax.random.normal(ks[9], (4, DIM), jnp.float32)
    p["board_w"], p["board_b"] = linear(ks[10], N_BOARD_OBS, DIM)
    # range_idx -> two hole cards LUT (all 52-choose-2 combos, deterministic order)
    pairs = [(i, j) for i in range(52) for j in range(i + 1, 52)]
    p["hole_lut"] = jnp.asarray(pairs, dtype=jnp.int32)
    return p


# -------------------------------------- main ----------------------------------------
if __name__ == "__main__":
    key = jax.random.PRNGKey(0)
    kp, ko, kr = jax.random.split(key, 3)
    params = init_params(kp)
    packed = pack_params(params)

    pub_obses = jax.random.uniform(ko, (BATCH, PUB_OBS_SIZE), jnp.float32)
    range_idxs = jax.random.randint(kr, (BATCH,), 0, RANGE_SIZE, dtype=jnp.int32)
    option_idxs = jnp.zeros((BATCH,), jnp.int32)

    y = jax.jit(forward)(pub_obses, range_idxs, option_idxs, packed)
    y = jax.block_until_ready(y)
    assert y.shape == (BATCH, DIM)

    # exact-math check (same mixed bf16/f32 precision as the kernel)
    y_mixed = reference_mixed(pub_obses, range_idxs, params)
    assert jnp.allclose(y, y_mixed, rtol=1e-2, atol=1e-2), "mismatch vs mixed-precision reference"
    # sanity check vs full-f32 reference (bf16 weight quantization tolerance)
    y_f32 = reference_f32(pub_obses, range_idxs, params)
    assert jnp.allclose(y, y_f32, rtol=5e-2, atol=5e-2), "mismatch vs f32 reference"

    print("KERNEL_OK")
</pallas_src>

<mosaic_0001>
module attributes {stable_mosaic.version = 11 : i64} {
  func.func @_mpm_kernel(%arg0: i32, %arg1: memref<16x128xbf16, #tpu.memory_space<vmem>>, %arg2: memref<16x128xf32, #tpu.memory_space<vmem>>, %arg3: memref<512x384xbf16, #tpu.memory_space<vmem>>, %arg4: memref<896x128xbf16, #tpu.memory_space<vmem>>, %arg5: memref<128x256xbf16, #tpu.memory_space<vmem>>, %arg6: memref<8x384xf32, #tpu.memory_space<vmem>>, %arg7: memref<16x128xf32, #tpu.memory_space<vmem>>) attributes {dimension_semantics = [#tpu.dimension_semantics<parallel>], iteration_bounds = array<i64: 1>, scalar_prefetch = 0 : i64, scratch_operands = 0 : i64, tpu.core_type = #tpu.core_type<tc>, window_params = [{transform_indices = @transform_0, window_bounds = array<i64: 16, 128>}, {transform_indices = @transform_1, window_bounds = array<i64: 16, 128>}, {pipeline_mode = #tpu.pipeline_mode<synchronous>, transform_indices = @transform_2, window_bounds = array<i64: 512, 384>}, {pipeline_mode = #tpu.pipeline_mode<synchronous>, transform_indices = @transform_3, window_bounds = array<i64: 896, 128>}, {pipeline_mode = #tpu.pipeline_mode<synchronous>, transform_indices = @transform_4, window_bounds = array<i64: 128, 256>}, {pipeline_mode = #tpu.pipeline_mode<synchronous>, transform_indices = @transform_5, window_bounds = array<i64: 8, 384>}, {transform_indices = @transform_6, window_bounds = array<i64: 16, 128>}]} {
    %c0 = arith.constant 0 : index
    %c0_0 = arith.constant 0 : index
    %0 = vector.load %arg1[%c0, %c0_0] : memref<16x128xbf16, #tpu.memory_space<vmem>>, vector<16x128xbf16>
    %c0_1 = arith.constant 0 : index
    %c0_2 = arith.constant 0 : index
    %1 = vector.load %arg6[%c0_1, %c0_2] : memref<8x384xf32, #tpu.memory_space<vmem>>, vector<1x384xf32>
    %c1 = arith.constant 1 : index
    %c0_3 = arith.constant 0 : index
    %2 = vector.load %arg6[%c1, %c0_3] : memref<8x384xf32, #tpu.memory_space<vmem>>, vector<1x384xf32>
    %c2 = arith.constant 2 : index
    %c0_4 = arith.constant 0 : index
    %3 = vector.load %arg6[%c2, %c0_4] : memref<8x384xf32, #tpu.memory_space<vmem>>, vector<1x128xf32>
    %c2_5 = arith.constant 2 : index
    %c128 = arith.constant 128 : index
    %4 = vector.load %arg6[%c2_5, %c128] : memref<8x384xf32, #tpu.memory_space<vmem>>, vector<1x128xf32>
    %c2_6 = arith.constant 2 : index
    %c256 = arith.constant 256 : index
    %5 = vector.load %arg6[%c2_6, %c256] : memref<8x384xf32, #tpu.memory_space<vmem>>, vector<1x128xf32>
    %c3 = arith.constant 3 : index
    %c0_7 = arith.constant 0 : index
    %6 = vector.load %arg6[%c3, %c0_7] : memref<8x384xf32, #tpu.memory_space<vmem>>, vector<1x128xf32>
    %c3_8 = arith.constant 3 : index
    %c128_9 = arith.constant 128 : index
    %7 = vector.load %arg6[%c3_8, %c128_9] : memref<8x384xf32, #tpu.memory_space<vmem>>, vector<1x128xf32>
    %c3_10 = arith.constant 3 : index
    %c256_11 = arith.constant 256 : index
    %8 = vector.load %arg6[%c3_10, %c256_11] : memref<8x384xf32, #tpu.memory_space<vmem>>, vector<1x128xf32>
    %c4 = arith.constant 4 : index
    %c0_12 = arith.constant 0 : index
    %9 = vector.load %arg6[%c4, %c0_12] : memref<8x384xf32, #tpu.memory_space<vmem>>, vector<1x128xf32>
    %c0_13 = arith.constant 0 : index
    %c0_14 = arith.constant 0 : index
    %10 = vector.load %arg5[%c0_13, %c0_14] : memref<128x256xbf16, #tpu.memory_space<vmem>>, vector<128x256xbf16>
    %cst = arith.constant dense<0.000000e+00> : vector<16x256xf32>
    %11 = tpu.matmul %0, %10, %cst {dimension_numbers = #tpu.dot_dimension_numbers<[1], [0], [0], [1], [0, 0, 1, 1], [], []>} : vector<16x128xbf16>, vector<128x256xbf16>, vector<16x256xf32> -> vector<16x256xf32>
    %12 = vector.extract_strided_slice %11 {offsets = [0, 0], sizes = [16, 128], strides = [1, 1]} : vector<16x256xf32> to vector<16x128xf32>
    %13 = vector.extract_strided_slice %11 {offsets = [0, 128], sizes = [16, 128], strides = [1, 1]} : vector<16x256xf32> to vector<16x128xf32>
    %c0_15 = arith.constant 0 : index
    %c0_16 = arith.constant 0 : index
    %14 = vector.load %arg2[%c0_15, %c0_16] : memref<16x128xf32, #tpu.memory_space<vmem>>, vector<16x128xf32>
    %15 = arith.addf %14, %13 : vector<16x128xf32>
    %c0_17 = arith.constant 0 : index
    %c0_18 = arith.constant 0 : index
    %16 = vector.load %arg3[%c0_17, %c0_18] : memref<512x384xbf16, #tpu.memory_space<vmem>>, vector<128x384xbf16>
    %17 = arith.truncf %15 : vector<16x128xf32> to vector<16x128xbf16>
    %cst_19 = arith.constant dense<0.000000e+00> : vector<16x384xf32>
    %18 = tpu.matmul %17, %16, %cst_19 {dimension_numbers = #tpu.dot_dimension_numbers<[1], [0], [0], [1], [0, 0, 1, 1], [], []>} : vector<16x128xbf16>, vector<128x384xbf16>, vector<16x384xf32> -> vector<16x384xf32>
    %19 = vector.broadcast %1 : vector<1x384xf32> to vector<16x384xf32>
    %20 = arith.addf %18, %19 : vector<16x384xf32>
    %cst_20 = arith.constant 0.000000e+00 : f32
    %21 = vector.broadcast %cst_20 : f32 to vector<16x384xf32>
    %22 = arith.maximumf %20, %21 : vector<16x384xf32>
    %c128_21 = arith.constant 128 : index
    %c0_22 = arith.constant 0 : index
    %23 = vector.load %arg3[%c128_21, %c0_22] : memref<512x384xbf16, #tpu.memory_space<vmem>>, vector<384x384xbf16>
    %24 = arith.truncf %22 : vector<16x384xf32> to vector<16x384xbf16>
    %cst_23 = arith.constant dense<0.000000e+00> : vector<16x384xf32>
    %25 = tpu.matmul %24, %23, %cst_23 {dimension_numbers = #tpu.dot_dimension_numbers<[1], [0], [0], [1], [0, 0, 1, 1], [], []>} : vector<16x384xbf16>, vector<384x384xbf16>, vector<16x384xf32> -> vector<16x384xf32>
    %26 = vector.broadcast %2 : vector<1x384xf32> to vector<16x384xf32>
    %27 = arith.addf %25, %26 : vector<16x384xf32>
    %28 = arith.addf %27, %22 : vector<16x384xf32>
    %cst_24 = arith.constant 0.000000e+00 : f32
    %29 = vector.broadcast %cst_24 : f32 to vector<16x384xf32>
    %30 = arith.maximumf %28, %29 : vector<16x384xf32>
    %c0_25 = arith.constant 0 : index
    %c0_26 = arith.constant 0 : index
    %31 = vector.load %arg4[%c0_25, %c0_26] : memref<896x128xbf16, #tpu.memory_space<vmem>>, vector<384x128xbf16>
    %32 = arith.truncf %30 : vector<16x384xf32> to vector<16x384xbf16>
    %cst_27 = arith.constant dense<0.000000e+00> : vector<16x128xf32>
    %33 = tpu.matmul %32, %31, %cst_27 {dimension_numbers = #tpu.dot_dimension_numbers<[1], [0], [0], [1], [0, 0, 1, 1], [], []>} : vector<16x384xbf16>, vector<384x128xbf16>, vector<16x128xf32> -> vector<16x128xf32>
    %34 = vector.broadcast %3 : vector<1x128xf32> to vector<16x128xf32>
    %35 = arith.addf %33, %34 : vector<16x128xf32>
    %cst_28 = arith.constant 0.000000e+00 : f32
    %36 = vector.broadcast %cst_28 : f32 to vector<16x128xf32>
    %37 = arith.maximumf %35, %36 : vector<16x128xf32>
    %38 = vector.broadcast %4 : vector<1x128xf32> to vector<16x128xf32>
    %39 = arith.addf %12, %38 : vector<16x128xf32>
    %cst_29 = arith.constant 0.000000e+00 : f32
    %40 = vector.broadcast %cst_29 : f32 to vector<16x128xf32>
    %41 = arith.maximumf %39, %40 : vector<16x128xf32>
    %c384 = arith.constant 384 : index
    %c0_30 = arith.constant 0 : index
    %42 = vector.load %arg4[%c384, %c0_30] : memref<896x128xbf16, #tpu.memory_space<vmem>>, vector<128x128xbf16>
    %43 = arith.truncf %41 : vector<16x128xf32> to vector<16x128xbf16>
    %cst_31 = arith.constant dense<0.000000e+00> : vector<16x128xf32>
    %44 = tpu.matmul %43, %42, %cst_31 {dimension_numbers = #tpu.dot_dimension_numbers<[1], [0], [0], [1], [0, 0, 1, 1], [], []>} : vector<16x128xbf16>, vector<128x128xbf16>, vector<16x128xf32> -> vector<16x128xf32>
    %45 = vector.broadcast %5 : vector<1x128xf32> to vector<16x128xf32>
    %46 = arith.addf %44, %45 : vector<16x128xf32>
    %47 = arith.addf %46, %41 : vector<16x128xf32>
    %cst_32 = arith.constant 0.000000e+00 : f32
    %48 = vector.broadcast %cst_32 : f32 to vector<16x128xf32>
    %49 = arith.maximumf %47, %48 : vector<16x128xf32>
    %c512 = arith.constant 512 : index
    %c0_33 = arith.constant 0 : index
    %50 = vector.load %arg4[%c512, %c0_33] : memref<896x128xbf16, #tpu.memory_space<vmem>>, vector<128x128xbf16>
    %51 = arith.truncf %37 : vector<16x128xf32> to vector<16x128xbf16>
    %cst_34 = arith.constant dense<0.000000e+00> : vector<16x128xf32>
    %52 = tpu.matmul %51, %50, %cst_34 {dimension_numbers = #tpu.dot_dimension_numbers<[1], [0], [0], [1], [0, 0, 1, 1], [], []>} : vector<16x128xbf16>, vector<128x128xbf16>, vector<16x128xf32> -> vector<16x128xf32>
    %c640 = arith.constant 640 : index
    %c0_35 = arith.constant 0 : index
    %53 = vector.load %arg4[%c640, %c0_35] : memref<896x128xbf16, #tpu.memory_space<vmem>>, vector<128x128xbf16>
    %54 = arith.truncf %49 : vector<16x128xf32> to vector<16x128xbf16>
    %cst_36 = arith.constant dense<0.000000e+00> : vector<16x128xf32>
    %55 = tpu.matmul %54, %53, %cst_36 {dimension_numbers = #tpu.dot_dimension_numbers<[1], [0], [0], [1], [0, 0, 1, 1], [], []>} : vector<16x128xbf16>, vector<128x128xbf16>, vector<16x128xf32> -> vector<16x128xf32>
    %56 = arith.addf %52, %55 : vector<16x128xf32>
    %57 = vector.broadcast %6 : vector<1x128xf32> to vector<16x128xf32>
    %58 = arith.addf %56, %57 : vector<16x128xf32>
    %cst_37 = arith.constant 0.000000e+00 : f32
    %59 = vector.broadcast %cst_37 : f32 to vector<16x128xf32>
    %60 = arith.maximumf %58, %59 : vector<16x128xf32>
    %c768 = arith.constant 768 : index
    %c0_38 = arith.constant 0 : index
    %61 = vector.load %arg4[%c768, %c0_38] : memref<896x128xbf16, #tpu.memory_space<vmem>>, vector<128x128xbf16>
    %62 = arith.truncf %60 : vector<16x128xf32> to vector<16x128xbf16>
    %cst_39 = arith.constant dense<0.000000e+00> : vector<16x128xf32>
    %63 = tpu.matmul %62, %61, %cst_39 {dimension_numbers = #tpu.dot_dimension_numbers<[1], [0], [0], [1], [0, 0, 1, 1], [], []>} : vector<16x128xbf16>, vector<128x128xbf16>, vector<16x128xf32> -> vector<16x128xf32>
    %64 = vector.broadcast %7 : vector<1x128xf32> to vector<16x128xf32>
    %65 = arith.addf %63, %64 : vector<16x128xf32>
    %66 = arith.addf %65, %60 : vector<16x128xf32>
    %cst_40 = arith.constant 0.000000e+00 : f32
    %67 = vector.broadcast %cst_40 : f32 to vector<16x128xf32>
    %68 = arith.maximumf %66, %67 : vector<16x128xf32>
    %cst_41 = arith.constant dense<0.000000e+00> : vector<16xf32>
    %69 = vector.multi_reduction <add>, %68, %cst_41 [1] : vector<16x128xf32> to vector<16xf32>
    %70 = vector.shape_cast %69 : vector<16xf32> to vector<16x1xf32>
    %cst_42 = arith.constant 1.280000e+02 : f32
    %71 = vector.broadcast %cst_42 : f32 to vector<16x1xf32>
    %72 = arith.divf %70, %71 : vector<16x1xf32>
    %73 = vector.broadcast %72 : vector<16x1xf32> to vector<16x128xf32>
    %74 = arith.subf %68, %73 : vector<16x128xf32>
    %75 = arith.mulf %74, %74 : vector<16x128xf32>
    %cst_43 = arith.constant dense<0.000000e+00> : vector<16xf32>
    %76 = vector.multi_reduction <add>, %75, %cst_43 [1] : vector<16x128xf32> to vector<16xf32>
    %77 = vector.shape_cast %76 : vector<16xf32> to vector<16x1xf32>
    %cst_44 = arith.constant 1.280000e+02 : f32
    %78 = vector.broadcast %cst_44 : f32 to vector<16x1xf32>
    %79 = arith.divf %77, %78 : vector<16x1xf32>
    %80 = vector.broadcast %72 : vector<16x1xf32> to vector<16x128xf32>
    %81 = arith.subf %68, %80 : vector<16x128xf32>
    %cst_45 = arith.constant 9.99999974E-6 : f32
    %82 = vector.broadcast %cst_45 : f32 to vector<16x1xf32>
    %83 = arith.addf %79, %82 : vector<16x1xf32>
    %84 = math.rsqrt %83 : vector<16x1xf32>
    %85 = vector.broadcast %84 : vector<16x1xf32> to vector<16x128xf32>
    %86 = arith.mulf %81, %85 : vector<16x128xf32>
    %87 = vector.broadcast %8 : vector<1x128xf32> to vector<16x128xf32>
    %88 = arith.mulf %86, %87 : vector<16x128xf32>
    %89 = vector.broadcast %9 : vector<1x128xf32> to vector<16x128xf32>
    %90 = arith.addf %88, %89 : vector<16x128xf32>
    %c0_46 = arith.constant 0 : index
    %c0_47 = arith.constant 0 : index
    %91 = vector.load %arg7[%c0_46, %c0_47] : memref<16x128xf32, #tpu.memory_space<vmem>>, vector<16x128xf32>
    tpu.vector_store %arg7[%c0_46, %c0_47], %90 {strides = array<i32>} : memref<16x128xf32, #tpu.memory_space<vmem>>, vector<16x128xf32>,
    return
  }
  func.func @transform_0(%arg0: i32) -> (i32, i32) {
    %c0_i32 = arith.constant 0 : i32
    %c0_i32_0 = arith.constant 0 : i32
    return %arg0, %c0_i32 : i32, i32
  }
  func.func @transform_1(%arg0: i32) -> (i32, i32) {
    %c0_i32 = arith.constant 0 : i32
    %c0_i32_0 = arith.constant 0 : i32
    return %arg0, %c0_i32 : i32, i32
  }
  func.func @transform_2(%arg0: i32) -> (i32, i32) {
    %c0_i32 = arith.constant 0 : i32
    %c0_i32_0 = arith.constant 0 : i32
    %c0_i32_1 = arith.constant 0 : i32
    return %c0_i32, %c0_i32_0 : i32, i32
  }
  func.func @transform_3(%arg0: i32) -> (i32, i32) {
    %c0_i32 = arith.constant 0 : i32
    %c0_i32_0 = arith.constant 0 : i32
    %c0_i32_1 = arith.constant 0 : i32
    return %c0_i32, %c0_i32_0 : i32, i32
  }
  func.func @transform_4(%arg0: i32) -> (i32, i32) {
    %c0_i32 = arith.constant 0 : i32
    %c0_i32_0 = arith.constant 0 : i32
    %c0_i32_1 = arith.constant 0 : i32
    return %c0_i32, %c0_i32_0 : i32, i32
  }
  func.func @transform_5(%arg0: i32) -> (i32, i32) {
    %c0_i32 = arith.constant 0 : i32
    %c0_i32_0 = arith.constant 0 : i32
    %c0_i32_1 = arith.constant 0 : i32
    return %c0_i32, %c0_i32_0 : i32, i32
  }
  func.func @transform_6(%arg0: i32) -> (i32, i32) {
    %c0_i32 = arith.constant 0 : i32
    %c0_i32_0 = arith.constant 0 : i32
    return %arg0, %c0_i32 : i32, i32
  }
}

</mosaic_0001>

<llo_original>
// kernel: forward.1
$region0: #{forward.1}
  #allocation0 [shape = 'u32[]', space=smem, size = 0x4, offset = 0x4, fixed_abs, tag = 'smem constant byte address 0x4 - core index']
  #allocation1 [shape = 'u32[144,128]{1,0:T(1,128)}', space=vmem, size = 0x12000, scoped, tag = 'internal scratch']
  %s0 = inlined_call_operand.vmem [shape: bf16[16,128], index: 0, kind: input, shape index: {}]
  %s1 = inlined_call_operand.vmem [shape: f32[16,128], index: 1, kind: input, shape index: {}]
  %s2 = inlined_call_operand.hbm [shape: bf16[512,384], index: 2, kind: input, shape index: {}]
  %s3 = inlined_call_operand.hbm [shape: bf16[896,128], index: 3, kind: input, shape index: {}]
  %s4 = inlined_call_operand.vmem [shape: bf16[128,256], index: 4, kind: input, shape index: {}]
  %s5 = inlined_call_operand.vmem [shape: f32[8,384], index: 5, kind: input, shape index: {}]
  %s6 = inlined_call_operand.hbm [shape: f32[16,128], index: 6, kind: output, shape index: {}]
  %s7 = sld [smem:[#allocation0]]
  $region42: #{forward.1} parent=0
    _
  %s9 = ssub.s32 1, %s7
  %s10 = scalar_select 0, %s9, %s7
  $region1: #{forward.1} parent=0
    #allocation2 [shape = 'u8[393216]{0}', space=vmem, size = 0x60000, scoped, tag = 'input window, operand 2, single buffered']
    #allocation3 [shape = 's32[1]{0}', space=sflag, size = 0x4, scoped, tag = 'scoped memory for forward.1']
    #allocation4 [shape = 's32[1]{0}', space=sflag, size = 0x4, scoped, tag = 'scoped memory for forward.1']
    #allocation5 [shape = 'u8[229376]{0}', space=vmem, size = 0x38000, scoped, tag = 'input window, operand 3, single buffered']
    #allocation6 [shape = 's32[1]{0}', space=sflag, size = 0x4, scoped, tag = 'scoped memory for forward.1']
    #allocation7 [shape = 'u8[8192]{0}', space=vmem, size = 0x2000, scoped, tag = 'output window, operand 0, single buffered']
    %11 = vsyncpa [#allocation3], 0
    %12 = vsyncpa [#allocation6], 0
    %13 = vsyncpa [#allocation4], 0
    // Predicated region
    $region2: #{forward.1} parent=1 // pred_check
      _
    $region3: #{forward.1} parent=1 // pred_check_branch
      %15 = sbr.rel (0) target = $region5
    $region4: #{forward.1} parent=1 // pred_region
      _
    $region5: #{forward.1} parent=1 // pred_fallthru
      _
    // Predicated region
    $region6: #{forward.1} parent=1 // pred_check
      _
    $region7: #{forward.1} parent=1 // pred_check_branch
      %17 = sbr.rel (0) target = $region9
    $region8: #{forward.1} parent=1 // pred_region
      _
    $region9: #{forward.1} parent=1 // pred_fallthru
      _
    // Predicated region
    $region10: #{forward.1} parent=1 // pred_check
      _
    $region11: #{forward.1} parent=1 // pred_check_branch
      %19 = sbr.rel (0) target = $region13
    $region12: #{forward.1} parent=1 // pred_region
      %s21 = ssub.s32 12288, 12288
      %22 = vsyncadd [#allocation3], %s21
      %s23 = sshll.u32 [#allocation2], 4
      %s24 = int_to_ptr.vmem [resolvable:$true] %s23
      %29 = dma.hbm_to_vmem [thread:$0]  %s2, 12288, %s24, [#allocation3], 192, 192, 12
    $region13: #{forward.1} parent=1 // pred_fallthru
      _
    // Predicated region
    $region14: #{forward.1} parent=1 // pred_check
      _
    $region15: #{forward.1} parent=1 // pred_check_branch
      %31 = sbr.rel (0) target = $region17
    $region16: #{forward.1} parent=1 // pred_region
      %s33 = ssub.s32 7168, 7168
      %34 = vsyncadd [#allocation6], %s33
      %s35 = sshll.u32 [#allocation5], 4
      %s36 = int_to_ptr.vmem [resolvable:$true] %s35
      %41 = dma.hbm_to_vmem [thread:$0]  %s3, 7168, %s36, [#allocation6], 64, 64, 4
    $region17: #{forward.1} parent=1 // pred_fallthru
      _
    // Predicated region
    $region18: #{forward.1} parent=1 // pred_check
      _
    $region19: #{forward.1} parent=1 // pred_check_branch
      %43 = sbr.rel (0) target = $region21
    $region20: #{forward.1} parent=1 // pred_region
      _
    $region21: #{forward.1} parent=1 // pred_fallthru
      _
    // Predicated region
    $region22: #{forward.1} parent=1 // pred_check
      _
    $region23: #{forward.1} parent=1 // pred_check_branch
      %45 = sbr.rel (0) target = $region25
    $region24: #{forward.1} parent=1 // pred_region
      _
    $region25: #{forward.1} parent=1 // pred_fallthru
      _
    // Predicated region
    $region26: #{forward.1} parent=1 // pred_check
      _
    $region27: #{forward.1} parent=1 // pred_check_branch
      %47 = sbr.rel (0) target = $region29
    $region28: #{forward.1} parent=1 // pred_region
      %48 = dma.done [#allocation3], 12288
    $region29: #{forward.1} parent=1 // pred_fallthru
      _
    // Predicated region
    $region30: #{forward.1} parent=1 // pred_check
      _
    $region31: #{forward.1} parent=1 // pred_check_branch
      %50 = sbr.rel (0) target = $region33
    $region32: #{forward.1} parent=1 // pred_region
      %51 = dma.done [#allocation6], 7168
    $region33: #{forward.1} parent=1 // pred_fallthru
      _
    %v53 = vld [vmem:[%s0] sm:$0xf]
    %v54 = vld [vmem:[%s0 + $0x4] sm:$0xf]
    %v55 = vld [vmem:[%s5] ss:$8 sm:$0x7]
    %s56 = scalar_lea.vmem %s5, 1
    %v57 = vld [vmem:[%s56] ss:$8 sm:$0x7]
    %v58 = vld [vmem:[%s5 + $0x2] ss:$0 sm:$0xff]
    %v59 = vld [vmem:[%s5 + $0xa] ss:$0 sm:$0xff]
    %v60 = vld [vmem:[%s5 + $0x12] ss:$0 sm:$0xff]
    %v61 = vld [vmem:[%s5 + $0x3] ss:$0 sm:$0xff]
    %v62 = vld [vmem:[%s5 + $0xb] ss:$0 sm:$0xff]
    %v63 = vld [vmem:[%s5 + $0x13] ss:$0 sm:$0xff]
    %v64 = vld [vmem:[%s5 + $0x4] ss:$0 sm:$0xff]
    %v65 = vld [vmem:[%s4] sm:$0xff]
    %v66 = vld [vmem:[%s4 + $0x8] sm:$0xff]
    %v67 = vld [vmem:[%s4 + $0x10] sm:$0xff]
    %v68 = vld [vmem:[%s4 + $0x18] sm:$0xff]
    %v69 = vld [vmem:[%s4 + $0x20] sm:$0xff]
    %v70 = vld [vmem:[%s4 + $0x28] sm:$0xff]
    %v71 = vld [vmem:[%s4 + $0x30] sm:$0xff]
    %v72 = vld [vmem:[%s4 + $0x38] sm:$0xff]
    %v73 = vld [vmem:[%s4 + $0x40] sm:$0xff]
    %v74 = vld [vmem:[%s4 + $0x48] sm:$0xff]
    %v75 = vld [vmem:[%s4 + $0x50] sm:$0xff]
    %v76 = vld [vmem:[%s4 + $0x58] sm:$0xff]
    %v77 = vld [vmem:[%s4 + $0x60] sm:$0xff]
    %v78 = vld [vmem:[%s4 + $0x68] sm:$0xff]
    %v79 = vld [vmem:[%s4 + $0x70] sm:$0xff]
    %v80 = vld [vmem:[%s4 + $0x78] sm:$0xff]
    %v83 = vunpack.c.l.b16 %v53
    %v84 = vunpack.c.l.b16 %v54
    %v85 = vpack.c.b16 %v84, %v83
    %v103 = vunpack.c.l.b16 %v65
    %v104 = vunpack.c.h.b16 %v65
    %v105 = vunpack.c.l.b16 %v66
    %v106 = vunpack.c.h.b16 %v66
    %v107 = vunpack.c.l.b16 %v67
    %v108 = vunpack.c.h.b16 %v67
    %v109 = vunpack.c.l.b16 %v68
    %v110 = vunpack.c.h.b16 %v68
    %v111 = vunpack.c.l.b16 %v69
    %v112 = vunpack.c.h.b16 %v69
    %v113 = vunpack.c.l.b16 %v70
    %v114 = vunpack.c.h.b16 %v70
    %v115 = vunpack.c.l.b16 %v71
    %v116 = vunpack.c.h.b16 %v71
    %v117 = vunpack.c.l.b16 %v72
    %v118 = vunpack.c.h.b16 %v72
    %v119 = vunpack.c.l.b16 %v73
    %v120 = vunpack.c.h.b16 %v73
    %v121 = vunpack.c.l.b16 %v74
    %v122 = vunpack.c.h.b16 %v74
    %v123 = vunpack.c.l.b16 %v75
    %v124 = vunpack.c.h.b16 %v75
    %v125 = vunpack.c.l.b16 %v76
    %v126 = vunpack.c.h.b16 %v76
    %v127 = vunpack.c.l.b16 %v77
    %v128 = vunpack.c.h.b16 %v77
    %v129 = vunpack.c.l.b16 %v78
    %v130 = vunpack.c.h.b16 %v78
    %v131 = vunpack.c.l.b16 %v79
    %v132 = vunpack.c.h.b16 %v79
    %v133 = vunpack.c.l.b16 %v80
    %v134 = vunpack.c.h.b16 %v80
    %v135 = vpack.c.b16 %v105, %v103
    %v136 = vpack.c.b16 %v106, %v104
    %v137 = vpack.c.b16 %v109, %v107
    %v138 = vpack.c.b16 %v110, %v108
    %v139 = vpack.c.b16 %v113, %v111
    %v140 = vpack.c.b16 %v114, %v112
    %v141 = vpack.c.b16 %v117, %v115
    %v142 = vpack.c.b16 %v118, %v116
    %v143 = vpack.c.b16 %v121, %v119
    %v144 = vpack.c.b16 %v122, %v120
    %v145 = vpack.c.b16 %v125, %v123
    %v146 = vpack.c.b16 %v126, %v124
    %v147 = vpack.c.b16 %v129, %v127
    %v148 = vpack.c.b16 %v130, %v128
    %v149 = vpack.c.b16 %v133, %v131
    %v150 = vpack.c.b16 %v134, %v132
    %167 = vmatprep.subr.bf16.mxu0 %v136
    %168 = vmatpush1.bf16.msra.mxu0 %v135
    %169 = vmatprep.subr.bf16.mxu0 %v138
    %170 = vmatpush1.bf16.msra.mxu0 %v137
    %171 = vmatprep.subr.bf16.mxu0 %v140
    %172 = vmatpush1.bf16.msra.mxu0 %v139
    %173 = vmatprep.subr.bf16.mxu0 %v142
    %174 = vmatpush1.bf16.msra.mxu0 %v141
    %175 = vmatprep.subr.bf16.mxu0 %v144
    %176 = vmatpush1.bf16.msra.mxu0 %v143
    %177 = vmatprep.subr.bf16.mxu0 %v146
    %178 = vmatpush1.bf16.msra.mxu0 %v145
    %179 = vmatprep.subr.bf16.mxu0 %v148
    %180 = vmatpush1.bf16.msra.mxu0 %v147
    %181 = vmatprep.subr.bf16.mxu0 %v150
    %182 = vmatpush1.bf16.msra.mxu0 %v149
    %183 = vmatprep.subr.bf16.mxu0 0
    %184 = vmatpush1.bf16.msra.mxu0 0
    %185 = vmatprep.subr.bf16.mxu0 0
    %186 = vmatpush1.bf16.msra.mxu0 0
    %187 = vmatprep.subr.bf16.mxu0 0
    %188 = vmatpush1.bf16.msra.mxu0 0
    %189 = vmatprep.subr.bf16.mxu0 0
    %190 = vmatpush1.bf16.msra.mxu0 0
    %191 = vmatprep.subr.bf16.mxu0 0
    %192 = vmatpush1.bf16.msra.mxu0 0
    %193 = vmatprep.subr.bf16.mxu0 0
    %194 = vmatpush1.bf16.msra.mxu0 0
    %195 = vmatprep.subr.bf16.mxu0 0
    %196 = vmatpush1.bf16.msra.mxu0 0
    %197 = vmatprep.subr.bf16.mxu0 0
    %198 = vmatpush1.bf16.msra.mxu0 0
    %199 = vmatprep.mubr.bf16.mxu0 0
    %200 = vmatmul.mubr.bf16.gmra.mrb[0].mxu0 %v85
    %v201 = vpop.f32.mrb[0].mxu0
    %v202 = vadd.f32 0.0, %v201
    %v203 = vpop.f32.mrb[0].mxu0
    %v204 = vadd.f32 0.0, %v203
    %v205 = vpop.f32.mrb[0].mxu0
    %v206 = vadd.f32 0.0, %v205
    %v207 = vpop.f32.mrb[0].mxu0
    %v208 = vadd.f32 0.0, %v207
    %209 = vdwg.mxu0
    %v210 = vld [vmem:[%s1] sm:$0xff]
    %v211 = vld [vmem:[%s1 + $0x8] sm:$0xff]
    %v212 = vadd.f32 %v210, %v204
    %v213 = vadd.f32 %v211, %v208
    %v214 = vld [vmem:[#allocation2] sm:$0xff]
    %v215 = vld [vmem:[#allocation2 + $0x8] sm:$0xf]
    %v216 = vld [vmem:[#allocation2 + $0xc] sm:$0xff]
    %v217 = vld [vmem:[#allocation2 + $0x14] sm:$0xf]
    %v218 = vld [vmem:[#allocation2 + $0x18] sm:$0xff]
    %v219 = vld [vmem:[#allocation2 + $0x20] sm:$0xf]
    %v220 = vld [vmem:[#allocation2 + $0x24] sm:$0xff]
    %v221 = vld [vmem:[#allocation2 + $0x2c] sm:$0xf]
    %v222 = vld [vmem:[#allocation2 + $0x30] sm:$0xff]
    %v223 = vld [vmem:[#allocation2 + $0x38] sm:$0xf]
    %v224 = vld [vmem:[#allocation2 + $0x3c] sm:$0xff]
    %v225 = vld [vmem:[#allocation2 + $0x44] sm:$0xf]
    %v226 = vld [vmem:[#allocation2 + $0x48] sm:$0xff]
    %v227 = vld [vmem:[#allocation2 + $0x50] sm:$0xf]
    %v228 = vld [vmem:[#allocation2 + $0x54] sm:$0xff]
    %v229 = vld [vmem:[#allocation2 + $0x5c] sm:$0xf]
    %v230 = vld [vmem:[#allocation2 + $0x60] sm:$0xff]
    %v231 = vld [vmem:[#allocation2 + $0x68] sm:$0xf]
    %v232 = vld [vmem:[#allocation2 + $0x6c] sm:$0xff]
    %v233 = vld [vmem:[#allocation2 + $0x74] sm:$0xf]
    %v234 = vld [vmem:[#allocation2 + $0x78] sm:$0xff]
    %v235 = vld [vmem:[#allocation2 + $0x80] sm:$0xf]
    %v236 = vld [vmem:[#allocation2 + $0x84] sm:$0xff]
    %v237 = vld [vmem:[#allocation2 + $0x8c] sm:$0xf]
    %v238 = vld [vmem:[#allocation2 + $0x90] sm:$0xff]
    %v239 = vld [vmem:[#allocation2 + $0x98] sm:$0xf]
    %v240 = vld [vmem:[#allocation2 + $0x9c] sm:$0xff]
    %v241 = vld [vmem:[#allocation2 + $0xa4] sm:$0xf]
    %v242 = vld [vmem:[#allocation2 + $0xa8] sm:$0xff]
    %v243 = vld [vmem:[#allocation2 + $0xb0] sm:$0xf]
    %v244 = vld [vmem:[#allocation2 + $0xb4] sm:$0xff]
    %v245 = vld [vmem:[#allocation2 + $0xbc] sm:$0xf]
    %v246 = vpack.c.bf16 %v213, %v212
    %v248 = vlaneseq
    %v249 = vshrl.u32 %v248, 7
    %v250 = vsub.s32 0, %v249
    %v251 = vrot.slane %v55, %v250
    %v252 = vlaneseq
    %v253 = vshrl.u32 %v252, 7
    %v254 = vsub.s32 1, %v253
    %v255 = vrot.slane %v55, %v254
    %v256 = vlaneseq
    %v257 = vshrl.u32 %v256, 7
    %v258 = vsub.s32 2, %v257
    %v259 = vrot.slane %v55, %v258
    %v295 = vunpack.c.l.b16 %v214
    %v296 = vunpack.c.h.b16 %v214
    %v297 = vunpack.c.l.b16 %v215
    %v298 = vunpack.c.l.b16 %v216
    %v299 = vunpack.c.h.b16 %v216
    %v300 = vunpack.c.l.b16 %v217
    %v301 = vunpack.c.l.b16 %v218
    %v302 = vunpack.c.h.b16 %v218
    %v303 = vunpack.c.l.b16 %v219
    %v304 = vunpack.c.l.b16 %v220
    %v305 = vunpack.c.h.b16 %v220
    %v306 = vunpack.c.l.b16 %v221
    %v307 = vunpack.c.l.b16 %v222
    %v308 = vunpack.c.h.b16 %v222
    %v309 = vunpack.c.l.b16 %v223
    %v310 = vunpack.c.l.b16 %v224
    %v311 = vunpack.c.h.b16 %v224
    %v312 = vunpack.c.l.b16 %v225
    %v313 = vunpack.c.l.b16 %v226
    %v314 = vunpack.c.h.b16 %v226
    %v315 = vunpack.c.l.b16 %v227
    %v316 = vunpack.c.l.b16 %v228
    %v317 = vunpack.c.h.b16 %v228
    %v318 = vunpack.c.l.b16 %v229
    %v319 = vunpack.c.l.b16 %v230
    %v320 = vunpack.c.h.b16 %v230
    %v321 = vunpack.c.l.b16 %v231
    %v322 = vunpack.c.l.b16 %v232
    %v323 = vunpack.c.h.b16 %v232
    %v324 = vunpack.c.l.b16 %v233
    %v325 = vunpack.c.l.b16 %v234
    %v326 = vunpack.c.h.b16 %v234
    %v327 = vunpack.c.l.b16 %v235
    %v328 = vunpack.c.l.b16 %v236
    %v329 = vunpack.c.h.b16 %v236
    %v330 = vunpack.c.l.b16 %v237
    %v331 = vunpack.c.l.b16 %v238
    %v332 = vunpack.c.h.b16 %v238
    %v333 = vunpack.c.l.b16 %v239
    %v334 = vunpack.c.l.b16 %v240
    %v335 = vunpack.c.h.b16 %v240
    %v336 = vunpack.c.l.b16 %v241
    %v337 = vunpack.c.l.b16 %v242
    %v338 = vunpack.c.h.b16 %v242
    %v339 = vunpack.c.l.b16 %v243
    %v340 = vunpack.c.l.b16 %v244
    %v341 = vunpack.c.h.b16 %v244
    %v342 = vunpack.c.l.b16 %v245
    %v343 = vpack.c.b16 %v298, %v295
    %v344 = vpack.c.b16 %v299, %v296
    %v345 = vpack.c.b16 %v300, %v297
    %v346 = vpack.c.b16 %v304, %v301
    %v347 = vpack.c.b16 %v305, %v302
    %v348 = vpack.c.b16 %v306, %v303
    %v349 = vpack.c.b16 %v310, %v307
    %v350 = vpack.c.b16 %v311, %v308
    %v351 = vpack.c.b16 %v312, %v309
    %v352 = vpack.c.b16 %v316, %v313
    %v353 = vpack.c.b16 %v317, %v314
    %v354 = vpack.c.b16 %v318, %v315
    %v355 = vpack.c.b16 %v322, %v319
    %v356 = vpack.c.b16 %v323, %v320
    %v357 = vpack.c.b16 %v324, %v321
    %v358 = vpack.c.b16 %v328, %v325
    %v359 = vpack.c.b16 %v329, %v326
    %v360 = vpack.c.b16 %v330, %v327
    %v361 = vpack.c.b16 %v334, %v331
    %v362 = vpack.c.b16 %v335, %v332
    %v363 = vpack.c.b16 %v336, %v333
    %v364 = vpack.c.b16 %v340, %v337
    %v365 = vpack.c.b16 %v341, %v338
    %v366 = vpack.c.b16 %v342, %v339
    %391 = vmatprep.subr.bf16.mxu0 %v344
    %392 = vmatpush1.bf16.msra.mxu0 %v343
    %393 = vmatprep.subr.bf16.mxu0 %v347
    %394 = vmatpush1.bf16.msra.mxu0 %v346
    %395 = vmatprep.subr.bf16.mxu0 %v350
    %396 = vmatpush1.bf16.msra.mxu0 %v349
    %397 = vmatprep.subr.bf16.mxu0 %v353
    %398 = vmatpush1.bf16.msra.mxu0 %v352
    %399 = vmatprep.subr.bf16.mxu0 %v356
    %400 = vmatpush1.bf16.msra.mxu0 %v355
    %401 = vmatprep.subr.bf16.mxu0 %v359
    %402 = vmatpush1.bf16.msra.mxu0 %v358
    %403 = vmatprep.subr.bf16.mxu0 %v362
    %404 = vmatpush1.bf16.msra.mxu0 %v361
    %405 = vmatprep.subr.bf16.mxu0 %v365
    %406 = vmatpush1.bf16.msra.mxu0 %v364
    %407 = vmatprep.subr.bf16.mxu0 0
    %408 = vmatpush1.bf16.msra.mxu0 0
    %409 = vmatprep.subr.bf16.mxu0 0
    %410 = vmatpush1.bf16.msra.mxu0 0
    %411 = vmatprep.subr.bf16.mxu0 0
    %412 = vmatpush1.bf16.msra.mxu0 0
    %413 = vmatprep.subr.bf16.mxu0 0
    %414 = vmatpush1.bf16.msra.mxu0 0
    %415 = vmatprep.subr.bf16.mxu0 0
    %416 = vmatpush1.bf16.msra.mxu0 0
    %417 = vmatprep.subr.bf16.mxu0 0
    %418 = vmatpush1.bf16.msra.mxu0 0
    %419 = vmatprep.subr.bf16.mxu0 0
    %420 = vmatpush1.bf16.msra.mxu0 0
    %421 = vmatprep.subr.bf16.mxu0 0
    %422 = vmatpush1.bf16.msra.mxu0 0
    %423 = vmatprep.mubr.bf16.mxu0 0
    %424 = vmatmul.mubr.bf16.gmra.mrb[0].mxu0 %v246
    %v425 = vpop.f32.mrb[0].mxu0
    %v426 = vadd.f32 %v251, %v425
    %v427 = vpop.f32.mrb[0].mxu0
    %v428 = vadd.f32 %v255, %v427
    %v429 = vpop.f32.mrb[0].mxu0
    %v430 = vadd.f32 %v251, %v429
    %v431 = vpop.f32.mrb[0].mxu0
    %v432 = vadd.f32 %v255, %v431
    %433 = vdwg.mxu0
    %434 = vmatprep.subr.bf16.mxu0 0
    %435 = vmatpush1.bf16.msra.mxu0 %v345
    %436 = vmatprep.subr.bf16.mxu0 0
    %437 = vmatpush1.bf16.msra.mxu0 %v348
    %438 = vmatprep.subr.bf16.mxu0 0
    %439 = vmatpush1.bf16.msra.mxu0 %v351
    %440 = vmatprep.subr.bf16.mxu0 0
    %441 = vmatpush1.bf16.msra.mxu0 %v354
    %442 = vmatprep.subr.bf16.mxu0 0
    %443 = vmatpush1.bf16.msra.mxu0 %v357
    %444 = vmatprep.subr.bf16.mxu0 0
    %445 = vmatpush1.bf16.msra.mxu0 %v360
    %446 = vmatprep.subr.bf16.mxu0 0
    %447 = vmatpush1.bf16.msra.mxu0 %v363
    %448 = vmatprep.subr.bf16.mxu0 0
    %449 = vmatpush1.bf16.msra.mxu0 %v366
    %450 = vmatprep.subr.bf16.mxu0 0
    %451 = vmatpush1.bf16.msra.mxu0 0
    %452 = vmatprep.subr.bf16.mxu0 0
    %453 = vmatpush1.bf16.msra.mxu0 0
    %454 = vmatprep.subr.bf16.mxu0 0
    %455 = vmatpush1.bf16.msra.mxu0 0
    %456 = vmatprep.subr.bf16.mxu0 0
    %457 = vmatpush1.bf16.msra.mxu0 0
    %458 = vmatprep.subr.bf16.mxu0 0
    %459 = vmatpush1.bf16.msra.mxu0 0
    %460 = vmatprep.subr.bf16.mxu0 0
    %461 = vmatpush1.bf16.msra.mxu0 0
    %462 = vmatprep.subr.bf16.mxu0 0
    %463 = vmatpush1.bf16.msra.mxu0 0
    %464 = vmatprep.subr.bf16.mxu0 0
    %465 = vmatpush1.bf16.msra.mxu0 0
    %466 = vmatprep.mubr.bf16.mxu0 0
    %467 = vmatmul.mubr.bf16.gmra.mrb[0].mxu0 %v246
    %v468 = vpop.f32.mrb[0].mxu0
    %v469 = vadd.f32 %v259, %v468
    %v470 = vpop.f32.mrb[0].mxu0
    %v471 = vpop.f32.mrb[0].mxu0
    %v472 = vadd.f32 %v259, %v471
    %v473 = vpop.f32.mrb[0].mxu0
    %474 = vdwg.mxu0
    %v475 = vmax.f32 %v426, 0.0
    %v476 = vmax.f32 %v428, 0.0
    %v477 = vmax.f32 %v469, 0.0
    %v478 = vmax.f32 %v430, 0.0
    %v479 = vmax.f32 %v432, 0.0
    %v480 = vmax.f32 %v472, 0.0
    %v481 = vld [vmem:[#allocation2 + $0xc0] sm:$0xff]
    %v482 = vld [vmem:[#allocation2 + $0xc8] sm:$0xf]
    %v483 = vld [vmem:[#allocation2 + $0xcc] sm:$0xff]
    %v484 = vld [vmem:[#allocation2 + $0xd4] sm:$0xf]
    %v485 = vld [vmem:[#allocation2 + $0xd8] sm:$0xff]
    %v486 = vld [vmem:[#allocation2 + $0xe0] sm:$0xf]
    %v487 = vld [vmem:[#allocation2 + $0xe4] sm:$0xff]
    %v488 = vld [vmem:[#allocation2 + $0xec] sm:$0xf]
    %v489 = vld [vmem:[#allocation2 + $0xf0] sm:$0xff]
    %v490 = vld [vmem:[#allocation2 + $0xf8] sm:$0xf]
    %v491 = vld [vmem:[#allocation2 + $0xfc] sm:$0xff]
    %v492 = vld [vmem:[#allocation2 + $0x104] sm:$0xf]
    %v493 = vld [vmem:[#allocation2 + $0x108] sm:$0xff]
    %v494 = vld [vmem:[#allocation2 + $0x110] sm:$0xf]
    %v495 = vld [vmem:[#allocation2 + $0x114] sm:$0xff]
    %v496 = vld [vmem:[#allocation2 + $0x11c] sm:$0xf]
    %v497 = vld [vmem:[#allocation2 + $0x120] sm:$0xff]
    %v498 = vld [vmem:[#allocation2 + $0x128] sm:$0xf]
    %v499 = vld [vmem:[#allocation2 + $0x12c] sm:$0xff]
    %v500 = vld [vmem:[#allocation2 + $0x134] sm:$0xf]
    %v501 = vld [vmem:[#allocation2 + $0x138] sm:$0xff]
    %v502 = vld [vmem:[#allocation2 + $0x140] sm:$0xf]
    %v503 = vld [vmem:[#allocation2 + $0x144] sm:$0xff]
    %v504 = vld [vmem:[#allocation2 + $0x14c] sm:$0xf]
    %v505 = vld [vmem:[#allocation2 + $0x150] sm:$0xff]
    %v506 = vld [vmem:[#allocation2 + $0x158] sm:$0xf]
    %v507 = vld [vmem:[#allocation2 + $0x15c] sm:$0xff]
    %v508 = vld [vmem:[#allocation2 + $0x164] sm:$0xf]
    %v509 = vld [vmem:[#allocation2 + $0x168] sm:$0xff]
    %v510 = vld [vmem:[#allocation2 + $0x170] sm:$0xf]
    %v511 = vld [vmem:[#allocation2 + $0x174] sm:$0xff]
    %v512 = vld [vmem:[#allocation2 + $0x17c] sm:$0xf]
    %v513 = vld [vmem:[#allocation2 + $0x180] sm:$0xff]
    %v514 = vld [vmem:[#allocation2 + $0x188] sm:$0xf]
    %v515 = vld [vmem:[#allocation2 + $0x18c] sm:$0xff]
    %v516 = vld [vmem:[#allocation2 + $0x194] sm:$0xf]
    %v517 = vld [vmem:[#allocation2 + $0x198] sm:$0xff]
    %v518 = vld [vmem:[#allocation2 + $0x1a0] sm:$0xf]
    %v519 = vld [vmem:[#allocation2 + $0x1a4] sm:$0xff]
    %v520 = vld [vmem:[#allocation2 + $0x1ac] sm:$0xf]
    %v521 = vld [vmem:[#allocation2 + $0x1b0] sm:$0xff]
    %v522 = vld [vmem:[#allocation2 + $0x1b8] sm:$0xf]
    %v523 = vld [vmem:[#allocation2 + $0x1bc] sm:$0xff]
    %v524 = vld [vmem:[#allocation2 + $0x1c4] sm:$0xf]
    %v525 = vld [vmem:[#allocation2 + $0x1c8] sm:$0xff]
    %v526 = vld [vmem:[#allocation2 + $0x1d0] sm:$0xf]
    %v527 = vld [vmem:[#allocation2 + $0x1d4] sm:$0xff]
    %v528 = vld [vmem:[#allocation2 + $0x1dc] sm:$0xf]
    %v529 = vld [vmem:[#allocation2 + $0x1e0] sm:$0xff]
    %v530 = vld [vmem:[#allocation2 + $0x1e8] sm:$0xf]
    %v531 = vld [vmem:[#allocation2 + $0x1ec] sm:$0xff]
    %v532 = vld [vmem:[#allocation2 + $0x1f4] sm:$0xf]
    %v533 = vld [vmem:[#allocation2 + $0x1f8] sm:$0xff]
    %v534 = vld [vmem:[#allocation2 + $0x200] sm:$0xf]
    %v535 = vld [vmem:[#allocation2 + $0x204] sm:$0xff]
    %v536 = vld [vmem:[#allocation2 + $0x20c] sm:$0xf]
    %v537 = vld [vmem:[#allocation2 + $0x210] sm:$0xff]
    %v538 = vld [vmem:[#allocation2 + $0x218] sm:$0xf]
    %v539 = vld [vmem:[#allocation2 + $0x21c] sm:$0xff]
    %v540 = vld [vmem:[#allocation2 + $0x224] sm:$0xf]
    %v541 = vld [vmem:[#allocation2 + $0x228] sm:$0xff]
    %v542 = vld [vmem:[#allocation2 + $0x230] sm:$0xf]
    %v543 = vld [vmem:[#allocation2 + $0x234] sm:$0xff]
    %v544 = vld [vmem:[#allocation2 + $0x23c] sm:$0xf]
    %v545 = vld [vmem:[#allocation2 + $0x240] sm:$0xff]
    %v546 = vld [vmem:[#allocation2 + $0x248] sm:$0xf]
    %v547 = vld [vmem:[#allocation2 + $0x24c] sm:$0xff]
    %v548 = vld [vmem:[#allocation2 + $0x254] sm:$0xf]
    %v549 = vld [vmem:[#allocation2 + $0x258] sm:$0xff]
    %v550 = vld [vmem:[#allocation2 + $0x260] sm:$0xf]
    %v551 = vld [vmem:[#allocation2 + $0x264] sm:$0xff]
    %v552 = vld [vmem:[#allocation2 + $0x26c] sm:$0xf]
    %v553 = vld [vmem:[#allocation2 + $0x270] sm:$0xff]
    %v554 = vld [vmem:[#allocation2 + $0x278] sm:$0xf]
    %v555 = vld [vmem:[#allocation2 + $0x27c] sm:$0xff]
    %v556 = vld [vmem:[#allocation2 + $0x284] sm:$0xf]
    %v557 = vld [vmem:[#allocation2 + $0x288] sm:$0xff]
    %v558 = vld [vmem:[#allocation2 + $0x290] sm:$0xf]
    %v559 = vld [vmem:[#allocation2 + $0x294] sm:$0xff]
    %v560 = vld [vmem:[#allocation2 + $0x29c] sm:$0xf]
    %v561 = vld [vmem:[#allocation2 + $0x2a0] sm:$0xff]
    %v562 = vld [vmem:[#allocation2 + $0x2a8] sm:$0xf]
    %v563 = vld [vmem:[#allocation2 + $0x2ac] sm:$0xff]
    %v564 = vld [vmem:[#allocation2 + $0x2b4] sm:$0xf]
    %v565 = vld [vmem:[#allocation2 + $0x2b8] sm:$0xff]
    %v566 = vld [vmem:[#allocation2 + $0x2c0] sm:$0xf]
    %v567 = vld [vmem:[#allocation2 + $0x2c4] sm:$0xff]
    %v568 = vld [vmem:[#allocation2 + $0x2cc] sm:$0xf]
    %v569 = vld [vmem:[#allocation2 + $0x2d0] sm:$0xff]
    %v570 = vld [vmem:[#allocation2 + $0x2d8] sm:$0xf]
    %v571 = vld [vmem:[#allocation2 + $0x2dc] sm:$0xff]
    %v572 = vld [vmem:[#allocation2 + $0x2e4] sm:$0xf]
    %v573 = vld [vmem:[#allocation2 + $0x2e8] sm:$0xff]
    %v574 = vld [vmem:[#allocation2 + $0x2f0] sm:$0xf]
    %v575 = vld [vmem:[#allocation2 + $0x2f4] sm:$0xff]
    %v576 = vld [vmem:[#allocation2 + $0x2fc] sm:$0xf]
    %v577 = vpack.c.bf16 %v478, %v475
    %v578 = vpack.c.bf16 %v479, %v476
    %v579 = vpack.c.bf16 %v480, %v477
    %v581 = vlaneseq
    %v582 = vshrl.u32 %v581, 7
    %v583 = vsub.s32 0, %v582
    %v584 = vrot.slane %v57, %v583
    %v585 = vlaneseq
    %v586 = vshrl.u32 %v585, 7
    %v587 = vsub.s32 1, %v586
    %v588 = vrot.slane %v57, %v587
    %v589 = vlaneseq
    %v590 = vshrl.u32 %v589, 7
    %v591 = vsub.s32 2, %v590
    %v592 = vrot.slane %v57, %v591
    %v692 = vunpack.c.l.b16 %v481
    %v693 = vunpack.c.h.b16 %v481
    %v694 = vunpack.c.l.b16 %v482
    %v695 = vunpack.c.l.b16 %v483
    %v696 = vunpack.c.h.b16 %v483
    %v697 = vunpack.c.l.b16 %v484
    %v698 = vunpack.c.l.b16 %v485
    %v699 = vunpack.c.h.b16 %v485
    %v700 = vunpack.c.l.b16 %v486
    %v701 = vunpack.c.l.b16 %v487
    %v702 = vunpack.c.h.b16 %v487
    %v703 = vunpack.c.l.b16 %v488
    %v704 = vunpack.c.l.b16 %v489
    %v705 = vunpack.c.h.b16 %v489
    %v706 = vunpack.c.l.b16 %v490
    %v707 = vunpack.c.l.b16 %v491
    %v708 = vunpack.c.h.b16 %v491
    %v709 = vunpack.c.l.b16 %v492
    %v710 = vunpack.c.l.b16 %v493
    %v711 = vunpack.c.h.b16 %v493
    %v712 = vunpack.c.l.b16 %v494
    %v713 = vunpack.c.l.b16 %v495
    %v714 = vunpack.c.h.b16 %v495
    %v715 = vunpack.c.l.b16 %v496
    %v716 = vunpack.c.l.b16 %v497
    %v717 = vunpack.c.h.b16 %v497
    %v718 = vunpack.c.l.b16 %v498
    %v719 = vunpack.c.l.b16 %v499
    %v720 = vunpack.c.h.b16 %v499
    %v721 = vunpack.c.l.b16 %v500
    %v722 = vunpack.c.l.b16 %v501
    %v723 = vunpack.c.h.b16 %v501
    %v724 = vunpack.c.l.b16 %v502
    %v725 = vunpack.c.l.b16 %v503
    %v726 = vunpack.c.h.b16 %v503
    %v727 = vunpack.c.l.b16 %v504
    %v728 = vunpack.c.l.b16 %v505
    %v729 = vunpack.c.h.b16 %v505
    %v730 = vunpack.c.l.b16 %v506
    %v731 = vunpack.c.l.b16 %v507
    %v732 = vunpack.c.h.b16 %v507
    %v733 = vunpack.c.l.b16 %v508
    %v734 = vunpack.c.l.b16 %v509
    %v735 = vunpack.c.h.b16 %v509
    %v736 = vunpack.c.l.b16 %v510
    %v737 = vunpack.c.l.b16 %v511
    %v738 = vunpack.c.h.b16 %v511
    %v739 = vunpack.c.l.b16 %v512
    %v740 = vunpack.c.l.b16 %v513
    %v741 = vunpack.c.h.b16 %v513
    %v742 = vunpack.c.l.b16 %v514
    %v743 = vunpack.c.l.b16 %v515
    %v744 = vunpack.c.h.b16 %v515
    %v745 = vunpack.c.l.b16 %v516
    %v746 = vunpack.c.l.b16 %v517
    %v747 = vunpack.c.h.b16 %v517
    %v748 = vunpack.c.l.b16 %v518
    %v749 = vunpack.c.l.b16 %v519
    %v750 = vunpack.c.h.b16 %v519
    %v751 = vunpack.c.l.b16 %v520
    %v752 = vunpack.c.l.b16 %v521
    %v753 = vunpack.c.h.b16 %v521
    %v754 = vunpack.c.l.b16 %v522
    %v755 = vunpack.c.l.b16 %v523
    %v756 = vunpack.c.h.b16 %v523
    %v757 = vunpack.c.l.b16 %v524
    %v758 = vunpack.c.l.b16 %v525
    %v759 = vunpack.c.h.b16 %v525
    %v760 = vunpack.c.l.b16 %v526
    %v761 = vunpack.c.l.b16 %v527
    %v762 = vunpack.c.h.b16 %v527
    %v763 = vunpack.c.l.b16 %v528
    %v764 = vunpack.c.l.b16 %v529
    %v765 = vunpack.c.h.b16 %v529
    %v766 = vunpack.c.l.b16 %v530
    %v767 = vunpack.c.l.b16 %v531
    %v768 = vunpack.c.h.b16 %v531
    %v769 = vunpack.c.l.b16 %v532
    %v770 = vunpack.c.l.b16 %v533
    %v771 = vunpack.c.h.b16 %v533
    %v772 = vunpack.c.l.b16 %v534
    %v773 = vunpack.c.l.b16 %v535
    %v774 = vunpack.c.h.b16 %v535
    %v775 = vunpack.c.l.b16 %v536
    %v776 = vunpack.c.l.b16 %v537
    %v777 = vunpack.c.h.b16 %v537
    %v778 = vunpack.c.l.b16 %v538
    %v779 = vunpack.c.l.b16 %v539
    %v780 = vunpack.c.h.b16 %v539
    %v781 = vunpack.c.l.b16 %v540
    %v782 = vunpack.c.l.b16 %v541
    %v783 = vunpack.c.h.b16 %v541
    %v784 = vunpack.c.l.b16 %v542
    %v785 = vunpack.c.l.b16 %v543
    %v786 = vunpack.c.h.b16 %v543
    %v787 = vunpack.c.l.b16 %v544
    %v788 = vunpack.c.l.b16 %v545
    %v789 = vunpack.c.h.b16 %v545
    %v790 = vunpack.c.l.b16 %v546
    %v791 = vunpack.c.l.b16 %v547
    %v792 = vunpack.c.h.b16 %v547
    %v793 = vunpack.c.l.b16 %v548
    %v794 = vunpack.c.l.b16 %v549
    %v795 = vunpack.c.h.b16 %v549
    %v796 = vunpack.c.l.b16 %v550
    %v797 = vunpack.c.l.b16 %v551
    %v798 = vunpack.c.h.b16 %v551
    %v799 = vunpack.c.l.b16 %v552
    %v800 = vunpack.c.l.b16 %v553
    %v801 = vunpack.c.h.b16 %v553
    %v802 = vunpack.c.l.b16 %v554
    %v803 = vunpack.c.l.b16 %v555
    %v804 = vunpack.c.h.b16 %v555
    %v805 = vunpack.c.l.b16 %v556
    %v806 = vunpack.c.l.b16 %v557
    %v807 = vunpack.c.h.b16 %v557
    %v808 = vunpack.c.l.b16 %v558
    %v809 = vunpack.c.l.b16 %v559
    %v810 = vunpack.c.h.b16 %v559
    %v811 = vunpack.c.l.b16 %v560
    %v812 = vunpack.c.l.b16 %v561
    %v813 = vunpack.c.h.b16 %v561
    %v814 = vunpack.c.l.b16 %v562
    %v815 = vunpack.c.l.b16 %v563
    %v816 = vunpack.c.h.b16 %v563
    %v817 = vunpack.c.l.b16 %v564
    %v818 = vunpack.c.l.b16 %v565
    %v819 = vunpack.c.h.b16 %v565
    %v820 = vunpack.c.l.b16 %v566
    %v821 = vunpack.c.l.b16 %v567
    %v822 = vunpack.c.h.b16 %v567
    %v823 = vunpack.c.l.b16 %v568
    %v824 = vunpack.c.l.b16 %v569
    %v825 = vunpack.c.h.b16 %v569
    %v826 = vunpack.c.l.b16 %v570
    %v827 = vunpack.c.l.b16 %v571
    %v828 = vunpack.c.h.b16 %v571
    %v829 = vunpack.c.l.b16 %v572
    %v830 = vunpack.c.l.b16 %v573
    %v831 = vunpack.c.h.b16 %v573
    %v832 = vunpack.c.l.b16 %v574
    %v833 = vunpack.c.l.b16 %v575
    %v834 = vunpack.c.h.b16 %v575
    %v835 = vunpack.c.l.b16 %v576
    %v836 = vpack.c.b16 %v695, %v692
    %v837 = vpack.c.b16 %v696, %v693
    %v838 = vpack.c.b16 %v697, %v694
    %v839 = vpack.c.b16 %v701, %v698
    %v840 = vpack.c.b16 %v702, %v699
    %v841 = vpack.c.b16 %v703, %v700
    %v842 = vpack.c.b16 %v707, %v704
    %v843 = vpack.c.b16 %v708, %v705
    %v844 = vpack.c.b16 %v709, %v706
    %v845 = vpack.c.b16 %v713, %v710
    %v846 = vpack.c.b16 %v714, %v711
    %v847 = vpack.c.b16 %v715, %v712
    %v848 = vpack.c.b16 %v719, %v716
    %v849 = vpack.c.b16 %v720, %v717
    %v850 = vpack.c.b16 %v721, %v718
    %v851 = vpack.c.b16 %v725, %v722
    %v852 = vpack.c.b16 %v726, %v723
    %v853 = vpack.c.b16 %v727, %v724
    %v854 = vpack.c.b16 %v731, %v728
    %v855 = vpack.c.b16 %v732, %v729
    %v856 = vpack.c.b16 %v733, %v730
    %v857 = vpack.c.b16 %v737, %v734
    %v858 = vpack.c.b16 %v738, %v735
    %v859 = vpack.c.b16 %v739, %v736
    %v860 = vpack.c.b16 %v743, %v740
    %v861 = vpack.c.b16 %v744, %v741
    %v862 = vpack.c.b16 %v745, %v742
    %v863 = vpack.c.b16 %v749, %v746
    %v864 = vpack.c.b16 %v750, %v747
    %v865 = vpack.c.b16 %v751, %v748
    %v866 = vpack.c.b16 %v755, %v752
    %v867 = vpack.c.b16 %v756, %v753
    %v868 = vpack.c.b16 %v757, %v754
    %v869 = vpack.c.b16 %v761, %v758
    %v870 = vpack.c.b16 %v762, %v759
    %v871 = vpack.c.b16 %v763, %v760
    %v872 = vpack.c.b16 %v767, %v764
    %v873 = vpack.c.b16 %v768, %v765
    %v874 = vpack.c.b16 %v769, %v766
    %v875 = vpack.c.b16 %v773, %v770
    %v876 = vpack.c.b16 %v774, %v771
    %v877 = vpack.c.b16 %v775, %v772
    %v878 = vpack.c.b16 %v779, %v776
    %v879 = vpack.c.b16 %v780, %v777
    %v880 = vpack.c.b16 %v781, %v778
    %v881 = vpack.c.b16 %v785, %v782
    %v882 = vpack.c.b16 %v786, %v783
    %v883 = vpack.c.b16 %v787, %v784
    %v884 = vpack.c.b16 %v791, %v788
    %v885 = vpack.c.b16 %v792, %v789
    %v886 = vpack.c.b16 %v793, %v790
    %v887 = vpack.c.b16 %v797, %v794
    %v888 = vpack.c.b16 %v798, %v795
    %v889 = vpack.c.b16 %v799, %v796
    %v890 = vpack.c.b16 %v803, %v800
    %v891 = vpack.c.b16 %v804, %v801
    %v892 = vpack.c.b16 %v805, %v802
    %v893 = vpack.c.b16 %v809, %v806
    %v894 = vpack.c.b16 %v810, %v807
    %v895 = vpack.c.b16 %v811, %v808
    %v896 = vpack.c.b16 %v815, %v812
    %v897 = vpack.c.b16 %v816, %v813
    %v898 = vpack.c.b16 %v817, %v814
    %v899 = vpack.c.b16 %v821, %v818
    %v900 = vpack.c.b16 %v822, %v819
    %v901 = vpack.c.b16 %v823, %v820
    %v902 = vpack.c.b16 %v827, %v824
    %v903 = vpack.c.b16 %v828, %v825
    %v904 = vpack.c.b16 %v829, %v826
    %v905 = vpack.c.b16 %v833, %v830
    %v906 = vpack.c.b16 %v834, %v831
    %v907 = vpack.c.b16 %v835, %v832
    %980 = vmatprep.subr.bf16.mxu0 %v837
    %981 = vmatpush1.bf16.msra.mxu0 %v836
    %982 = vmatprep.subr.bf16.mxu0 %v840
    %983 = vmatpush1.bf16.msra.mxu0 %v839
    %984 = vmatprep.subr.bf16.mxu0 %v843
    %985 = vmatpush1.bf16.msra.mxu0 %v842
    %986 = vmatprep.subr.bf16.mxu0 %v846
    %987 = vmatpush1.bf16.msra.mxu0 %v845
    %988 = vmatprep.subr.bf16.mxu0 %v849
    %989 = vmatpush1.bf16.msra.mxu0 %v848
    %990 = vmatprep.subr.bf16.mxu0 %v852
    %991 = vmatpush1.bf16.msra.mxu0 %v851
    %992 = vmatprep.subr.bf16.mxu0 %v855
    %993 = vmatpush1.bf16.msra.mxu0 %v854
    %994 = vmatprep.subr.bf16.mxu0 %v858
    %995 = vmatpush1.bf16.msra.mxu0 %v857
    %996 = vmatprep.subr.bf16.mxu0 %v861
    %997 = vmatpush1.bf16.msra.mxu0 %v860
    %998 = vmatprep.subr.bf16.mxu0 %v864
    %999 = vmatpush1.bf16.msra.mxu0 %v863
    %1000 = vmatprep.subr.bf16.mxu0 %v867
    %1001 = vmatpush1.bf16.msra.mxu0 %v866
    %1002 = vmatprep.subr.bf16.mxu0 %v870
    %1003 = vmatpush1.bf16.msra.mxu0 %v869
    %1004 = vmatprep.subr.bf16.mxu0 %v873
    %1005 = vmatpush1.bf16.msra.mxu0 %v872
    %1006 = vmatprep.subr.bf16.mxu0 %v876
    %1007 = vmatpush1.bf16.msra.mxu0 %v875
    %1008 = vmatprep.subr.bf16.mxu0 %v879
    %1009 = vmatpush1.bf16.msra.mxu0 %v878
    %1010 = vmatprep.subr.bf16.mxu0 %v882
    %1011 = vmatpush1.bf16.msra.mxu0 %v881
    %1012 = vmatprep.mubr.bf16.mxu0 %v578
    %1013 = vmatmul.mubr.bf16.gmra.mrb[0].mxu0 %v577
    %v1014 = vpop.f32.mrb[0].mxu0
    %v1015 = vadd.f32 %v584, %v1014
    %v1016 = vpop.f32.mrb[0].mxu0
    %v1017 = vadd.f32 %v588, %v1016
    %v1018 = vpop.f32.mrb[0].mxu0
    %v1019 = vadd.f32 %v584, %v1018
    %v1020 = vpop.f32.mrb[0].mxu0
    %v1021 = vadd.f32 %v588, %v1020
    %1022 = vdwg.mxu0
    %1023 = vmatprep.subr.bf16.mxu0 %v885
    %1024 = vmatpush1.bf16.msra.mxu0 %v884
    %1025 = vmatprep.subr.bf16.mxu0 %v888
    %1026 = vmatpush1.bf16.msra.mxu0 %v887
    %1027 = vmatprep.subr.bf16.mxu0 %v891
    %1028 = vmatpush1.bf16.msra.mxu0 %v890
    %1029 = vmatprep.subr.bf16.mxu0 %v894
    %1030 = vmatpush1.bf16.msra.mxu0 %v893
    %1031 = vmatprep.subr.bf16.mxu0 %v897
    %1032 = vmatpush1.bf16.msra.mxu0 %v896
    %1033 = vmatprep.subr.bf16.mxu0 %v900
    %1034 = vmatpush1.bf16.msra.mxu0 %v899
    %1035 = vmatprep.subr.bf16.mxu0 %v903
    %1036 = vmatpush1.bf16.msra.mxu0 %v902
    %1037 = vmatprep.subr.bf16.mxu0 %v906
    %1038 = vmatpush1.bf16.msra.mxu0 %v905
    %1039 = vmatprep.subr.bf16.mxu0 0
    %1040 = vmatpush1.bf16.msra.mxu0 0
    %1041 = vmatprep.subr.bf16.mxu0 0
    %1042 = vmatpush1.bf16.msra.mxu0 0
    %1043 = vmatprep.subr.bf16.mxu0 0
    %1044 = vmatpush1.bf16.msra.mxu0 0
    %1045 = vmatprep.subr.bf16.mxu0 0
    %1046 = vmatpush1.bf16.msra.mxu0 0
    %1047 = vmatprep.subr.bf16.mxu0 0
    %1048 = vmatpush1.bf16.msra.mxu0 0
    %1049 = vmatprep.subr.bf16.mxu0 0
    %1050 = vmatpush1.bf16.msra.mxu0 0
    %1051 = vmatprep.subr.bf16.mxu0 0
    %1052 = vmatpush1.bf16.msra.mxu0 0
    %1053 = vmatprep.subr.bf16.mxu0 0
    %1054 = vmatpush1.bf16.msra.mxu0 0
    %1055 = vmatprep.mubr.bf16.mxu0 0
    %1056 = vmatmul.mubr.bf16.gmra.mrb[0].mxu0 %v579
    %v1057 = vpop.f32.mrb[0].mxu0
    %v1058 = vadd.f32 %v1015, %v1057
    %v1059 = vpop.f32.mrb[0].mxu0
    %v1060 = vadd.f32 %v1017, %v1059
    %v1061 = vpop.f32.mrb[0].mxu0
    %v1062 = vadd.f32 %v1019, %v1061
    %v1063 = vpop.f32.mrb[0].mxu0
    %v1064 = vadd.f32 %v1021, %v1063
    %1065 = vdwg.mxu0
    %1066 = vmatprep.subr.bf16.mxu0 0
    %1067 = vmatpush1.bf16.msra.mxu0 %v838
    %1068 = vmatprep.subr.bf16.mxu0 0
    %1069 = vmatpush1.bf16.msra.mxu0 %v841
    %1070 = vmatprep.subr.bf16.mxu0 0
    %1071 = vmatpush1.bf16.msra.mxu0 %v844
    %1072 = vmatprep.subr.bf16.mxu0 0
    %1073 = vmatpush1.bf16.msra.mxu0 %v847
    %1074 = vmatprep.subr.bf16.mxu0 0
    %1075 = vmatpush1.bf16.msra.mxu0 %v850
    %1076 = vmatprep.subr.bf16.mxu0 0
    %1077 = vmatpush1.bf16.msra.mxu0 %v853
    %1078 = vmatprep.subr.bf16.mxu0 0
    %1079 = vmatpush1.bf16.msra.mxu0 %v856
    %1080 = vmatprep.subr.bf16.mxu0 0
    %1081 = vmatpush1.bf16.msra.mxu0 %v859
    %1082 = vmatprep.subr.bf16.mxu0 0
    %1083 = vmatpush1.bf16.msra.mxu0 %v862
    %1084 = vmatprep.subr.bf16.mxu0 0
    %1085 = vmatpush1.bf16.msra.mxu0 %v865
    %1086 = vmatprep.subr.bf16.mxu0 0
    %1087 = vmatpush1.bf16.msra.mxu0 %v868
    %1088 = vmatprep.subr.bf16.mxu0 0
    %1089 = vmatpush1.bf16.msra.mxu0 %v871
    %1090 = vmatprep.subr.bf16.mxu0 0
    %1091 = vmatpush1.bf16.msra.mxu0 %v874
    %1092 = vmatprep.subr.bf16.mxu0 0
    %1093 = vmatpush1.bf16.msra.mxu0 %v877
    %1094 = vmatprep.subr.bf16.mxu0 0
    %1095 = vmatpush1.bf16.msra.mxu0 %v880
    %1096 = vmatprep.subr.bf16.mxu0 0
    %1097 = vmatpush1.bf16.msra.mxu0 %v883
    %1098 = vmatprep.mubr.bf16.mxu0 %v578
    %1099 = vmatmul.mubr.bf16.gmra.mrb[0].mxu0 %v577
    %v1100 = vpop.f32.mrb[0].mxu0
    %v1101 = vadd.f32 %v592, %v1100
    %v1102 = vpop.f32.mrb[0].mxu0
    %v1103 = vpop.f32.mrb[0].mxu0
    %v1104 = vadd.f32 %v592, %v1103
    %v1105 = vpop.f32.mrb[0].mxu0
    %1106 = vdwg.mxu0
    %1107 = vmatprep.subr.bf16.mxu0 0
    %1108 = vmatpush1.bf16.msra.mxu0 %v886
    %1109 = vmatprep.subr.bf16.mxu0 0
    %1110 = vmatpush1.bf16.msra.mxu0 %v889
    %1111 = vmatprep.subr.bf16.mxu0 0
    %1112 = vmatpush1.bf16.msra.mxu0 %v892
    %1113 = vmatprep.subr.bf16.mxu0 0
    %1114 = vmatpush1.bf16.msra.mxu0 %v895
    %1115 = vmatprep.subr.bf16.mxu0 0
    %1116 = vmatpush1.bf16.msra.mxu0 %v898
    %1117 = vmatprep.subr.bf16.mxu0 0
    %1118 = vmatpush1.bf16.msra.mxu0 %v901
    %1119 = vmatprep.subr.bf16.mxu0 0
    %1120 = vmatpush1.bf16.msra.mxu0 %v904
    %1121 = vmatprep.subr.bf16.mxu0 0
    %1122 = vmatpush1.bf16.msra.mxu0 %v907
    %1123 = vmatprep.subr.bf16.mxu0 0
    %1124 = vmatpush1.bf16.msra.mxu0 0
    %1125 = vmatprep.subr.bf16.mxu0 0
    %1126 = vmatpush1.bf16.msra.mxu0 0
    %1127 = vmatprep.subr.bf16.mxu0 0
    %1128 = vmatpush1.bf16.msra.mxu0 0
    %1129 = vmatprep.subr.bf16.mxu0 0
    %1130 = vmatpush1.bf16.msra.mxu0 0
    %1131 = vmatprep.subr.bf16.mxu0 0
    %1132 = vmatpush1.bf16.msra.mxu0 0
    %1133 = vmatprep.subr.bf16.mxu0 0
    %1134 = vmatpush1.bf16.msra.mxu0 0
    %1135 = vmatprep.subr.bf16.mxu0 0
    %1136 = vmatpush1.bf16.msra.mxu0 0
    %1137 = vmatprep.subr.bf16.mxu0 0
    %1138 = vmatpush1.bf16.msra.mxu0 0
    %1139 = vmatprep.mubr.bf16.mxu0 0
    %1140 = vmatmul.mubr.bf16.gmra.mrb[0].mxu0 %v579
    %v1141 = vpop.f32.mrb[0].mxu0
    %v1142 = vadd.f32 %v1101, %v1141
    %v1143 = vpop.f32.mrb[0].mxu0
    %v1144 = vpop.f32.mrb[0].mxu0
    %v1145 = vadd.f32 %v1104, %v1144
    %v1146 = vpop.f32.mrb[0].mxu0
    %1147 = vdwg.mxu0
    %v1148 = vadd.f32 %v1058, %v475
    %v1149 = vadd.f32 %v1060, %v476
    %v1150 = vadd.f32 %v1142, %v477
    %v1151 = vadd.f32 %v1062, %v478
    %v1152 = vadd.f32 %v1064, %v479
    %v1153 = vadd.f32 %v1145, %v480
    %v1154 = vmax.f32 %v1148, 0.0
    %v1155 = vmax.f32 %v1149, 0.0
    %v1156 = vmax.f32 %v1150, 0.0
    %v1157 = vmax.f32 %v1151, 0.0
    %v1158 = vmax.f32 %v1152, 0.0
    %v1159 = vmax.f32 %v1153, 0.0
    %v1160 = vld [vmem:[#allocation5] sm:$0xf]
    %v1161 = vld [vmem:[#allocation5 + $0x4] sm:$0xf]
    %v1162 = vld [vmem:[#allocation5 + $0x8] sm:$0xf]
    %v1163 = vld [vmem:[#allocation5 + $0xc] sm:$0xf]
    %v1164 = vld [vmem:[#allocation5 + $0x10] sm:$0xf]
    %v1165 = vld [vmem:[#allocation5 + $0x14] sm:$0xf]
    %v1166 = vld [vmem:[#allocation5 + $0x18] sm:$0xf]
    %v1167 = vld [vmem:[#allocation5 + $0x1c] sm:$0xf]
    %v1168 = vld [vmem:[#allocation5 + $0x20] sm:$0xf]
    %v1169 = vld [vmem:[#allocation5 + $0x24] sm:$0xf]
    %v1170 = vld [vmem:[#allocation5 + $0x28] sm:$0xf]
    %v1171 = vld [vmem:[#allocation5 + $0x2c] sm:$0xf]
    %v1172 = vld [vmem:[#allocation5 + $0x30] sm:$0xf]
    %v1173 = vld [vmem:[#allocation5 + $0x34] sm:$0xf]
    %v1174 = vld [vmem:[#allocation5 + $0x38] sm:$0xf]
    %v1175 = vld [vmem:[#allocation5 + $0x3c] sm:$0xf]
    %v1176 = vld [vmem:[#allocation5 + $0x40] sm:$0xf]
    %v1177 = vld [vmem:[#allocation5 + $0x44] sm:$0xf]
    %v1178 = vld [vmem:[#allocation5 + $0x48] sm:$0xf]
    %v1179 = vld [vmem:[#allocation5 + $0x4c] sm:$0xf]
    %v1180 = vld [vmem:[#allocation5 + $0x50] sm:$0xf]
    %v1181 = vld [vmem:[#allocation5 + $0x54] sm:$0xf]
    %v1182 = vld [vmem:[#allocation5 + $0x58] sm:$0xf]
    %v1183 = vld [vmem:[#allocation5 + $0x5c] sm:$0xf]
    %v1184 = vld [vmem:[#allocation5 + $0x60] sm:$0xf]
    %v1185 = vld [vmem:[#allocation5 + $0x64] sm:$0xf]
    %v1186 = vld [vmem:[#allocation5 + $0x68] sm:$0xf]
    %v1187 = vld [vmem:[#allocation5 + $0x6c] sm:$0xf]
    %v1188 = vld [vmem:[#allocation5 + $0x70] sm:$0xf]
    %v1189 = vld [vmem:[#allocation5 + $0x74] sm:$0xf]
    %v1190 = vld [vmem:[#allocation5 + $0x78] sm:$0xf]
    %v1191 = vld [vmem:[#allocation5 + $0x7c] sm:$0xf]
    %v1192 = vld [vmem:[#allocation5 + $0x80] sm:$0xf]
    %v1193 = vld [vmem:[#allocation5 + $0x84] sm:$0xf]
    %v1194 = vld [vmem:[#allocation5 + $0x88] sm:$0xf]
    %v1195 = vld [vmem:[#allocation5 + $0x8c] sm:$0xf]
    %v1196 = vld [vmem:[#allocation5 + $0x90] sm:$0xf]
    %v1197 = vld [vmem:[#allocation5 + $0x94] sm:$0xf]
    %v1198 = vld [vmem:[#allocation5 + $0x98] sm:$0xf]
    %v1199 = vld [vmem:[#allocation5 + $0x9c] sm:$0xf]
    %v1200 = vld [vmem:[#allocation5 + $0xa0] sm:$0xf]
    %v1201 = vld [vmem:[#allocation5 + $0xa4] sm:$0xf]
    %v1202 = vld [vmem:[#allocation5 + $0xa8] sm:$0xf]
    %v1203 = vld [vmem:[#allocation5 + $0xac] sm:$0xf]
    %v1204 = vld [vmem:[#allocation5 + $0xb0] sm:$0xf]
    %v1205 = vld [vmem:[#allocation5 + $0xb4] sm:$0xf]
    %v1206 = vld [vmem:[#allocation5 + $0xb8] sm:$0xf]
    %v1207 = vld [vmem:[#allocation5 + $0xbc] sm:$0xf]
    %v1208 = vpack.c.bf16 %v1157, %v1154
    %v1209 = vpack.c.bf16 %v1158, %v1155
    %v1210 = vpack.c.bf16 %v1159, %v1156
    %v1259 = vunpack.c.l.b16 %v1160
    %v1260 = vunpack.c.l.b16 %v1161
    %v1261 = vunpack.c.l.b16 %v1162
    %v1262 = vunpack.c.l.b16 %v1163
    %v1263 = vunpack.c.l.b16 %v1164
    %v1264 = vunpack.c.l.b16 %v1165
    %v1265 = vunpack.c.l.b16 %v1166
    %v1266 = vunpack.c.l.b16 %v1167
    %v1267 = vunpack.c.l.b16 %v1168
    %v1268 = vunpack.c.l.b16 %v1169
    %v1269 = vunpack.c.l.b16 %v1170
    %v1270 = vunpack.c.l.b16 %v1171
    %v1271 = vunpack.c.l.b16 %v1172
    %v1272 = vunpack.c.l.b16 %v1173
    %v1273 = vunpack.c.l.b16 %v1174
    %v1274 = vunpack.c.l.b16 %v1175
    %v1275 = vunpack.c.l.b16 %v1176
    %v1276 = vunpack.c.l.b16 %v1177
    %v1277 = vunpack.c.l.b16 %v1178
    %v1278 = vunpack.c.l.b16 %v1179
    %v1279 = vunpack.c.l.b16 %v1180
    %v1280 = vunpack.c.l.b16 %v1181
    %v1281 = vunpack.c.l.b16 %v1182
    %v1282 = vunpack.c.l.b16 %v1183
    %v1283 = vunpack.c.l.b16 %v1184
    %v1284 = vunpack.c.l.b16 %v1185
    %v1285 = vunpack.c.l.b16 %v1186
    %v1286 = vunpack.c.l.b16 %v1187
    %v1287 = vunpack.c.l.b16 %v1188
    %v1288 = vunpack.c.l.b16 %v1189
    %v1289 = vunpack.c.l.b16 %v1190
    %v1290 = vunpack.c.l.b16 %v1191
    %v1291 = vunpack.c.l.b16 %v1192
    %v1292 = vunpack.c.l.b16 %v1193
    %v1293 = vunpack.c.l.b16 %v1194
    %v1294 = vunpack.c.l.b16 %v1195
    %v1295 = vunpack.c.l.b16 %v1196
    %v1296 = vunpack.c.l.b16 %v1197
    %v1297 = vunpack.c.l.b16 %v1198
    %v1298 = vunpack.c.l.b16 %v1199
    %v1299 = vunpack.c.l.b16 %v1200
    %v1300 = vunpack.c.l.b16 %v1201
    %v1301 = vunpack.c.l.b16 %v1202
    %v1302 = vunpack.c.l.b16 %v1203
    %v1303 = vunpack.c.l.b16 %v1204
    %v1304 = vunpack.c.l.b16 %v1205
    %v1305 = vunpack.c.l.b16 %v1206
    %v1306 = vunpack.c.l.b16 %v1207
    %v1307 = vpack.c.b16 %v1260, %v1259
    %v1308 = vpack.c.b16 %v1262, %v1261
    %v1309 = vpack.c.b16 %v1264, %v1263
    %v1310 = vpack.c.b16 %v1266, %v1265
    %v1311 = vpack.c.b16 %v1268, %v1267
    %v1312 = vpack.c.b16 %v1270, %v1269
    %v1313 = vpack.c.b16 %v1272, %v1271
    %v1314 = vpack.c.b16 %v1274, %v1273
    %v1315 = vpack.c.b16 %v1276, %v1275
    %v1316 = vpack.c.b16 %v1278, %v1277
    %v1317 = vpack.c.b16 %v1280, %v1279
    %v1318 = vpack.c.b16 %v1282, %v1281
    %v1319 = vpack.c.b16 %v1284, %v1283
    %v1320 = vpack.c.b16 %v1286, %v1285
    %v1321 = vpack.c.b16 %v1288, %v1287
    %v1322 = vpack.c.b16 %v1290, %v1289
    %v1323 = vpack.c.b16 %v1292, %v1291
    %v1324 = vpack.c.b16 %v1294, %v1293
    %v1325 = vpack.c.b16 %v1296, %v1295
    %v1326 = vpack.c.b16 %v1298, %v1297
    %v1327 = vpack.c.b16 %v1300, %v1299
    %v1328 = vpack.c.b16 %v1302, %v1301
    %v1329 = vpack.c.b16 %v1304, %v1303
    %v1330 = vpack.c.b16 %v1306, %v1305
    %1355 = vmatprep.subr.bf16.mxu0 0
    %1356 = vmatpush1.bf16.msra.mxu0 %v1307
    %1357 = vmatprep.subr.bf16.mxu0 0
    %1358 = vmatpush1.bf16.msra.mxu0 %v1308
    %1359 = vmatprep.subr.bf16.mxu0 0
    %1360 = vmatpush1.bf16.msra.mxu0 %v1309
    %1361 = vmatprep.subr.bf16.mxu0 0
    %1362 = vmatpush1.bf16.msra.mxu0 %v1310
    %1363 = vmatprep.subr.bf16.mxu0 0
    %1364 = vmatpush1.bf16.msra.mxu0 %v1311
    %1365 = vmatprep.subr.bf16.mxu0 0
    %1366 = vmatpush1.bf16.msra.mxu0 %v1312
    %1367 = vmatprep.subr.bf16.mxu0 0
    %1368 = vmatpush1.bf16.msra.mxu0 %v1313
    %1369 = vmatprep.subr.bf16.mxu0 0
    %1370 = vmatpush1.bf16.msra.mxu0 %v1314
    %1371 = vmatprep.subr.bf16.mxu0 0
    %1372 = vmatpush1.bf16.msra.mxu0 %v1315
    %1373 = vmatprep.subr.bf16.mxu0 0
    %1374 = vmatpush1.bf16.msra.mxu0 %v1316
    %1375 = vmatprep.subr.bf16.mxu0 0
    %1376 = vmatpush1.bf16.msra.mxu0 %v1317
    %1377 = vmatprep.subr.bf16.mxu0 0
    %1378 = vmatpush1.bf16.msra.mxu0 %v1318
    %1379 = vmatprep.subr.bf16.mxu0 0
    %1380 = vmatpush1.bf16.msra.mxu0 %v1319
    %1381 = vmatprep.subr.bf16.mxu0 0
    %1382 = vmatpush1.bf16.msra.mxu0 %v1320
    %1383 = vmatprep.subr.bf16.mxu0 0
    %1384 = vmatpush1.bf16.msra.mxu0 %v1321
    %1385 = vmatprep.subr.bf16.mxu0 0
    %1386 = vmatpush1.bf16.msra.mxu0 %v1322
    %1387 = vmatprep.mubr.bf16.mxu0 %v1209
    %1388 = vmatmul.mubr.bf16.gmra.mrb[0].mxu0 %v1208
    %v1389 = vpop.f32.mrb[0].mxu0
    %v1390 = vadd.f32 %v58, %v1389
    %v1391 = vpop.f32.mrb[0].mxu0
    %v1392 = vpop.f32.mrb[0].mxu0
    %v1393 = vadd.f32 %v58, %v1392
    %v1394 = vpop.f32.mrb[0].mxu0
    %1395 = vdwg.mxu0
    %1396 = vmatprep.subr.bf16.mxu0 0
    %1397 = vmatpush1.bf16.msra.mxu0 %v1323
    %1398 = vmatprep.subr.bf16.mxu0 0
    %1399 = vmatpush1.bf16.msra.mxu0 %v1324
    %1400 = vmatprep.subr.bf16.mxu0 0
    %1401 = vmatpush1.bf16.msra.mxu0 %v1325
    %1402 = vmatprep.subr.bf16.mxu0 0
    %1403 = vmatpush1.bf16.msra.mxu0 %v1326
    %1404 = vmatprep.subr.bf16.mxu0 0
    %1405 = vmatpush1.bf16.msra.mxu0 %v1327
    %1406 = vmatprep.subr.bf16.mxu0 0
    %1407 = vmatpush1.bf16.msra.mxu0 %v1328
    %1408 = vmatprep.subr.bf16.mxu0 0
    %1409 = vmatpush1.bf16.msra.mxu0 %v1329
    %1410 = vmatprep.subr.bf16.mxu0 0
    %1411 = vmatpush1.bf16.msra.mxu0 %v1330
    %1412 = vmatprep.subr.bf16.mxu0 0
    %1413 = vmatpush1.bf16.msra.mxu0 0
    %1414 = vmatprep.subr.bf16.mxu0 0
    %1415 = vmatpush1.bf16.msra.mxu0 0
    %1416 = vmatprep.subr.bf16.mxu0 0
    %1417 = vmatpush1.bf16.msra.mxu0 0
    %1418 = vmatprep.subr.bf16.mxu0 0
    %1419 = vmatpush1.bf16.msra.mxu0 0
    %1420 = vmatprep.subr.bf16.mxu0 0
    %1421 = vmatpush1.bf16.msra.mxu0 0
    %1422 = vmatprep.subr.bf16.mxu0 0
    %1423 = vmatpush1.bf16.msra.mxu0 0
    %1424 = vmatprep.subr.bf16.mxu0 0
    %1425 = vmatpush1.bf16.msra.mxu0 0
    %1426 = vmatprep.subr.bf16.mxu0 0
    %1427 = vmatpush1.bf16.msra.mxu0 0
    %1428 = vmatprep.mubr.bf16.mxu0 0
    %1429 = vmatmul.mubr.bf16.gmra.mrb[0].mxu0 %v1210
    %v1430 = vpop.f32.mrb[0].mxu0
    %v1431 = vadd.f32 %v1390, %v1430
    %v1432 = vpop.f32.mrb[0].mxu0
    %v1433 = vpop.f32.mrb[0].mxu0
    %v1434 = vadd.f32 %v1393, %v1433
    %v1435 = vpop.f32.mrb[0].mxu0
    %1436 = vdwg.mxu0
    %v1437 = vmax.f32 %v1431, 0.0
    %v1438 = vmax.f32 %v1434, 0.0
    %v1439 = vadd.f32 %v202, %v59
    %v1440 = vadd.f32 %v206, %v59
    %v1441 = vmax.f32 %v1439, 0.0
    %v1442 = vmax.f32 %v1440, 0.0
    %v1443 = vld [vmem:[#allocation5 + $0xc0] sm:$0xf]
    %v1444 = vld [vmem:[#allocation5 + $0xc4] sm:$0xf]
    %v1445 = vld [vmem:[#allocation5 + $0xc8] sm:$0xf]
    %v1446 = vld [vmem:[#allocation5 + $0xcc] sm:$0xf]
    %v1447 = vld [vmem:[#allocation5 + $0xd0] sm:$0xf]
    %v1448 = vld [vmem:[#allocation5 + $0xd4] sm:$0xf]
    %v1449 = vld [vmem:[#allocation5 + $0xd8] sm:$0xf]
    %v1450 = vld [vmem:[#allocation5 + $0xdc] sm:$0xf]
    %v1451 = vld [vmem:[#allocation5 + $0xe0] sm:$0xf]
    %v1452 = vld [vmem:[#allocation5 + $0xe4] sm:$0xf]
    %v1453 = vld [vmem:[#allocation5 + $0xe8] sm:$0xf]
    %v1454 = vld [vmem:[#allocation5 + $0xec] sm:$0xf]
    %v1455 = vld [vmem:[#allocation5 + $0xf0] sm:$0xf]
    %v1456 = vld [vmem:[#allocation5 + $0xf4] sm:$0xf]
    %v1457 = vld [vmem:[#allocation5 + $0xf8] sm:$0xf]
    %v1458 = vld [vmem:[#allocation5 + $0xfc] sm:$0xf]
    %v1459 = vpack.c.bf16 %v1442, %v1441
    %v1476 = vunpack.c.l.b16 %v1443
    %v1477 = vunpack.c.l.b16 %v1444
    %v1478 = vunpack.c.l.b16 %v1445
    %v1479 = vunpack.c.l.b16 %v1446
    %v1480 = vunpack.c.l.b16 %v1447
    %v1481 = vunpack.c.l.b16 %v1448
    %v1482 = vunpack.c.l.b16 %v1449
    %v1483 = vunpack.c.l.b16 %v1450
    %v1484 = vunpack.c.l.b16 %v1451
    %v1485 = vunpack.c.l.b16 %v1452
    %v1486 = vunpack.c.l.b16 %v1453
    %v1487 = vunpack.c.l.b16 %v1454
    %v1488 = vunpack.c.l.b16 %v1455
    %v1489 = vunpack.c.l.b16 %v1456
    %v1490 = vunpack.c.l.b16 %v1457
    %v1491 = vunpack.c.l.b16 %v1458
    %v1492 = vpack.c.b16 %v1477, %v1476
    %v1493 = vpack.c.b16 %v1479, %v1478
    %v1494 = vpack.c.b16 %v1481, %v1480
    %v1495 = vpack.c.b16 %v1483, %v1482
    %v1496 = vpack.c.b16 %v1485, %v1484
    %v1497 = vpack.c.b16 %v1487, %v1486
    %v1498 = vpack.c.b16 %v1489, %v1488
    %v1499 = vpack.c.b16 %v1491, %v1490
    %1508 = vmatprep.subr.bf16.mxu0 0
    %1509 = vmatpush1.bf16.msra.mxu0 %v1492
    %1510 = vmatprep.subr.bf16.mxu0 0
    %1511 = vmatpush1.bf16.msra.mxu0 %v1493
    %1512 = vmatprep.subr.bf16.mxu0 0
    %1513 = vmatpush1.bf16.msra.mxu0 %v1494
    %1514 = vmatprep.subr.bf16.mxu0 0
    %1515 = vmatpush1.bf16.msra.mxu0 %v1495
    %1516 = vmatprep.subr.bf16.mxu0 0
    %1517 = vmatpush1.bf16.msra.mxu0 %v1496
    %1518 = vmatprep.subr.bf16.mxu0 0
    %1519 = vmatpush1.bf16.msra.mxu0 %v1497
    %1520 = vmatprep.subr.bf16.mxu0 0
    %1521 = vmatpush1.bf16.msra.mxu0 %v1498
    %1522 = vmatprep.subr.bf16.mxu0 0
    %1523 = vmatpush1.bf16.msra.mxu0 %v1499
    %1524 = vmatprep.subr.bf16.mxu0 0
    %1525 = vmatpush1.bf16.msra.mxu0 0
    %1526 = vmatprep.subr.bf16.mxu0 0
    %1527 = vmatpush1.bf16.msra.mxu0 0
    %1528 = vmatprep.subr.bf16.mxu0 0
    %1529 = vmatpush1.bf16.msra.mxu0 0
    %1530 = vmatprep.subr.bf16.mxu0 0
    %1531 = vmatpush1.bf16.msra.mxu0 0
    %1532 = vmatprep.subr.bf16.mxu0 0
    %1533 = vmatpush1.bf16.msra.mxu0 0
    %1534 = vmatprep.subr.bf16.mxu0 0
    %1535 = vmatpush1.bf16.msra.mxu0 0
    %1536 = vmatprep.subr.bf16.mxu0 0
    %1537 = vmatpush1.bf16.msra.mxu0 0
    %1538 = vmatprep.subr.bf16.mxu0 0
    %1539 = vmatpush1.bf16.msra.mxu0 0
    %1540 = vmatprep.mubr.bf16.mxu0 0
    %1541 = vmatmul.mubr.bf16.gmra.mrb[0].mxu0 %v1459
    %v1542 = vpop.f32.mrb[0].mxu0
    %v1543 = vadd.f32 %v60, %v1542
    %v1544 = vpop.f32.mrb[0].mxu0
    %v1545 = vpop.f32.mrb[0].mxu0
    %v1546 = vadd.f32 %v60, %v1545
    %v1547 = vpop.f32.mrb[0].mxu0
    %1548 = vdwg.mxu0
    %v1549 = vadd.f32 %v1543, %v1441
    %v1550 = vadd.f32 %v1546, %v1442
    %v1551 = vmax.f32 %v1549, 0.0
    %v1552 = vmax.f32 %v1550, 0.0
    %v1553 = vld [vmem:[#allocation5 + $0x100] sm:$0xf]
    %v1554 = vld [vmem:[#allocation5 + $0x104] sm:$0xf]
    %v1555 = vld [vmem:[#allocation5 + $0x108] sm:$0xf]
    %v1556 = vld [vmem:[#allocation5 + $0x10c] sm:$0xf]
    %v1557 = vld [vmem:[#allocation5 + $0x110] sm:$0xf]
    %v1558 = vld [vmem:[#allocation5 + $0x114] sm:$0xf]
    %v1559 = vld [vmem:[#allocation5 + $0x118] sm:$0xf]
    %v1560 = vld [vmem:[#allocation5 + $0x11c] sm:$0xf]
    %v1561 = vld [vmem:[#allocation5 + $0x120] sm:$0xf]
    %v1562 = vld [vmem:[#allocation5 + $0x124] sm:$0xf]
    %v1563 = vld [vmem:[#allocation5 + $0x128] sm:$0xf]
    %v1564 = vld [vmem:[#allocation5 + $0x12c] sm:$0xf]
    %v1565 = vld [vmem:[#allocation5 + $0x130] sm:$0xf]
    %v1566 = vld [vmem:[#allocation5 + $0x134] sm:$0xf]
    %v1567 = vld [vmem:[#allocation5 + $0x138] sm:$0xf]
    %v1568 = vld [vmem:[#allocation5 + $0x13c] sm:$0xf]
    %v1569 = vpack.c.bf16 %v1438, %v1437
    %v1570 = vld [vmem:[#allocation5 + $0x140] sm:$0xf]
    %v1571 = vld [vmem:[#allocation5 + $0x144] sm:$0xf]
    %v1572 = vld [vmem:[#allocation5 + $0x148] sm:$0xf]
    %v1573 = vld [vmem:[#allocation5 + $0x14c] sm:$0xf]
    %v1574 = vld [vmem:[#allocation5 + $0x150] sm:$0xf]
    %v1575 = vld [vmem:[#allocation5 + $0x154] sm:$0xf]
    %v1576 = vld [vmem:[#allocation5 + $0x158] sm:$0xf]
    %v1577 = vld [vmem:[#allocation5 + $0x15c] sm:$0xf]
    %v1578 = vld [vmem:[#allocation5 + $0x160] sm:$0xf]
    %v1579 = vld [vmem:[#allocation5 + $0x164] sm:$0xf]
    %v1580 = vld [vmem:[#allocation5 + $0x168] sm:$0xf]
    %v1581 = vld [vmem:[#allocation5 + $0x16c] sm:$0xf]
    %v1582 = vld [vmem:[#allocation5 + $0x170] sm:$0xf]
    %v1583 = vld [vmem:[#allocation5 + $0x174] sm:$0xf]
    %v1584 = vld [vmem:[#allocation5 + $0x178] sm:$0xf]
    %v1585 = vld [vmem:[#allocation5 + $0x17c] sm:$0xf]
    %v1586 = vpack.c.bf16 %v1552, %v1551
    %v1603 = vunpack.c.l.b16 %v1570
    %v1604 = vunpack.c.l.b16 %v1571
    %v1605 = vunpack.c.l.b16 %v1572
    %v1606 = vunpack.c.l.b16 %v1573
    %v1607 = vunpack.c.l.b16 %v1574
    %v1608 = vunpack.c.l.b16 %v1575
    %v1609 = vunpack.c.l.b16 %v1576
    %v1610 = vunpack.c.l.b16 %v1577
    %v1611 = vunpack.c.l.b16 %v1578
    %v1612 = vunpack.c.l.b16 %v1579
    %v1613 = vunpack.c.l.b16 %v1580
    %v1614 = vunpack.c.l.b16 %v1581
    %v1615 = vunpack.c.l.b16 %v1582
    %v1616 = vunpack.c.l.b16 %v1583
    %v1617 = vunpack.c.l.b16 %v1584
    %v1618 = vunpack.c.l.b16 %v1585
    %v1619 = vpack.c.b16 %v1604, %v1603
    %v1620 = vpack.c.b16 %v1606, %v1605
    %v1621 = vpack.c.b16 %v1608, %v1607
    %v1622 = vpack.c.b16 %v1610, %v1609
    %v1623 = vpack.c.b16 %v1612, %v1611
    %v1624 = vpack.c.b16 %v1614, %v1613
    %v1625 = vpack.c.b16 %v1616, %v1615
    %v1626 = vpack.c.b16 %v1618, %v1617
    %1635 = vmatprep.subr.bf16.mxu0 0
    %1636 = vmatpush1.bf16.msra.mxu0 %v1619
    %1637 = vmatprep.subr.bf16.mxu0 0
    %1638 = vmatpush1.bf16.msra.mxu0 %v1620
    %1639 = vmatprep.subr.bf16.mxu0 0
    %1640 = vmatpush1.bf16.msra.mxu0 %v1621
    %1641 = vmatprep.subr.bf16.mxu0 0
    %1642 = vmatpush1.bf16.msra.mxu0 %v1622
    %1643 = vmatprep.subr.bf16.mxu0 0
    %1644 = vmatpush1.bf16.msra.mxu0 %v1623
    %1645 = vmatprep.subr.bf16.mxu0 0
    %1646 = vmatpush1.bf16.msra.mxu0 %v1624
    %1647 = vmatprep.subr.bf16.mxu0 0
    %1648 = vmatpush1.bf16.msra.mxu0 %v1625
    %1649 = vmatprep.subr.bf16.mxu0 0
    %1650 = vmatpush1.bf16.msra.mxu0 %v1626
    %1651 = vmatprep.subr.bf16.mxu0 0
    %1652 = vmatpush1.bf16.msra.mxu0 0
    %1653 = vmatprep.subr.bf16.mxu0 0
    %1654 = vmatpush1.bf16.msra.mxu0 0
    %1655 = vmatprep.subr.bf16.mxu0 0
    %1656 = vmatpush1.bf16.msra.mxu0 0
    %1657 = vmatprep.subr.bf16.mxu0 0
    %1658 = vmatpush1.bf16.msra.mxu0 0
    %1659 = vmatprep.subr.bf16.mxu0 0
    %1660 = vmatpush1.bf16.msra.mxu0 0
    %1661 = vmatprep.subr.bf16.mxu0 0
    %1662 = vmatpush1.bf16.msra.mxu0 0
    %1663 = vmatprep.subr.bf16.mxu0 0
    %1664 = vmatpush1.bf16.msra.mxu0 0
    %1665 = vmatprep.subr.bf16.mxu0 0
    %1666 = vmatpush1.bf16.msra.mxu0 0
    %1667 = vmatprep.mubr.bf16.mxu0 0
    %1668 = vmatmul.mubr.bf16.gmra.mrb[0].mxu0 %v1586
    %v1669 = vpop.f32.mrb[0].mxu0
    %v1670 = vadd.f32 0.0, %v1669
    %v1671 = vpop.f32.mrb[0].mxu0
    %v1672 = vpop.f32.mrb[0].mxu0
    %v1673 = vadd.f32 0.0, %v1672
    %v1674 = vpop.f32.mrb[0].mxu0
    %1675 = vdwg.mxu0
    %v1692 = vunpack.c.l.b16 %v1553
    %v1693 = vunpack.c.l.b16 %v1554
    %v1694 = vunpack.c.l.b16 %v1555
    %v1695 = vunpack.c.l.b16 %v1556
    %v1696 = vunpack.c.l.b16 %v1557
    %v1697 = vunpack.c.l.b16 %v1558
    %v1698 = vunpack.c.l.b16 %v1559
    %v1699 = vunpack.c.l.b16 %v1560
    %v1700 = vunpack.c.l.b16 %v1561
    %v1701 = vunpack.c.l.b16 %v1562
    %v1702 = vunpack.c.l.b16 %v1563
    %v1703 = vunpack.c.l.b16 %v1564
    %v1704 = vunpack.c.l.b16 %v1565
    %v1705 = vunpack.c.l.b16 %v1566
    %v1706 = vunpack.c.l.b16 %v1567
    %v1707 = vunpack.c.l.b16 %v1568
    %v1708 = vpack.c.b16 %v1693, %v1692
    %v1709 = vpack.c.b16 %v1695, %v1694
    %v1710 = vpack.c.b16 %v1697, %v1696
    %v1711 = vpack.c.b16 %v1699, %v1698
    %v1712 = vpack.c.b16 %v1701, %v1700
    %v1713 = vpack.c.b16 %v1703, %v1702
    %v1714 = vpack.c.b16 %v1705, %v1704
    %v1715 = vpack.c.b16 %v1707, %v1706
    %1724 = vmatprep.subr.bf16.mxu0 0
    %1725 = vmatpush1.bf16.msra.mxu0 %v1708
    %1726 = vmatprep.subr.bf16.mxu0 0
    %1727 = vmatpush1.bf16.msra.mxu0 %v1709
    %1728 = vmatprep.subr.bf16.mxu0 0
    %1729 = vmatpush1.bf16.msra.mxu0 %v1710
    %1730 = vmatprep.subr.bf16.mxu0 0
    %1731 = vmatpush1.bf16.msra.mxu0 %v1711
    %1732 = vmatprep.subr.bf16.mxu0 0
    %1733 = vmatpush1.bf16.msra.mxu0 %v1712
    %1734 = vmatprep.subr.bf16.mxu0 0
    %1735 = vmatpush1.bf16.msra.mxu0 %v1713
    %1736 = vmatprep.subr.bf16.mxu0 0
    %1737 = vmatpush1.bf16.msra.mxu0 %v1714
    %1738 = vmatprep.subr.bf16.mxu0 0
    %1739 = vmatpush1.bf16.msra.mxu0 %v1715
    %1740 = vmatprep.subr.bf16.mxu0 0
    %1741 = vmatpush1.bf16.msra.mxu0 0
    %1742 = vmatprep.subr.bf16.mxu0 0
    %1743 = vmatpush1.bf16.msra.mxu0 0
    %1744 = vmatprep.subr.bf16.mxu0 0
    %1745 = vmatpush1.bf16.msra.mxu0 0
    %1746 = vmatprep.subr.bf16.mxu0 0
    %1747 = vmatpush1.bf16.msra.mxu0 0
    %1748 = vmatprep.subr.bf16.mxu0 0
    %1749 = vmatpush1.bf16.msra.mxu0 0
    %1750 = vmatprep.subr.bf16.mxu0 0
    %1751 = vmatpush1.bf16.msra.mxu0 0
    %1752 = vmatprep.subr.bf16.mxu0 0
    %1753 = vmatpush1.bf16.msra.mxu0 0
    %1754 = vmatprep.subr.bf16.mxu0 0
    %1755 = vmatpush1.bf16.msra.mxu0 0
    %1756 = vmatprep.mubr.bf16.mxu0 0
    %1757 = vmatmul.mubr.bf16.gmra.mrb[0].mxu0 %v1569
    %v1758 = vpop.f32.mrb[0].mxu0
    %v1759 = vadd.f32 %v1670, %v1758
    %v1760 = vpop.f32.mrb[0].mxu0
    %v1761 = vpop.f32.mrb[0].mxu0
    %v1762 = vadd.f32 %v1673, %v1761
    %v1763 = vpop.f32.mrb[0].mxu0
    %1764 = vdwg.mxu0
    %v1765 = vadd.f32 %v1759, %v61
    %v1766 = vadd.f32 %v1762, %v61
    %v1767 = vmax.f32 %v1765, 0.0
    %v1768 = vmax.f32 %v1766, 0.0
    %v1769 = vld [vmem:[#allocation5 + $0x180] sm:$0xf]
    %v1770 = vld [vmem:[#allocation5 + $0x184] sm:$0xf]
    %v1771 = vld [vmem:[#allocation5 + $0x188] sm:$0xf]
    %v1772 = vld [vmem:[#allocation5 + $0x18c] sm:$0xf]
    %v1773 = vld [vmem:[#allocation5 + $0x190] sm:$0xf]
    %v1774 = vld [vmem:[#allocation5 + $0x194] sm:$0xf]
    %v1775 = vld [vmem:[#allocation5 + $0x198] sm:$0xf]
    %v1776 = vld [vmem:[#allocation5 + $0x19c] sm:$0xf]
    %v1777 = vld [vmem:[#allocation5 + $0x1a0] sm:$0xf]
    %v1778 = vld [vmem:[#allocation5 + $0x1a4] sm:$0xf]
    %v1779 = vld [vmem:[#allocation5 + $0x1a8] sm:$0xf]
    %v1780 = vld [vmem:[#allocation5 + $0x1ac] sm:$0xf]
    %v1781 = vld [vmem:[#allocation5 + $0x1b0] sm:$0xf]
    %v1782 = vld [vmem:[#allocation5 + $0x1b4] sm:$0xf]
    %v1783 = vld [vmem:[#allocation5 + $0x1b8] sm:$0xf]
    %v1784 = vld [vmem:[#allocation5 + $0x1bc] sm:$0xf]
    %v1785 = vpack.c.bf16 %v1768, %v1767
    %v1802 = vunpack.c.l.b16 %v1769
    %v1803 = vunpack.c.l.b16 %v1770
    %v1804 = vunpack.c.l.b16 %v1771
    %v1805 = vunpack.c.l.b16 %v1772
    %v1806 = vunpack.c.l.b16 %v1773
    %v1807 = vunpack.c.l.b16 %v1774
    %v1808 = vunpack.c.l.b16 %v1775
    %v1809 = vunpack.c.l.b16 %v1776
    %v1810 = vunpack.c.l.b16 %v1777
    %v1811 = vunpack.c.l.b16 %v1778
    %v1812 = vunpack.c.l.b16 %v1779
    %v1813 = vunpack.c.l.b16 %v1780
    %v1814 = vunpack.c.l.b16 %v1781
    %v1815 = vunpack.c.l.b16 %v1782
    %v1816 = vunpack.c.l.b16 %v1783
    %v1817 = vunpack.c.l.b16 %v1784
    %v1818 = vpack.c.b16 %v1803, %v1802
    %v1819 = vpack.c.b16 %v1805, %v1804
    %v1820 = vpack.c.b16 %v1807, %v1806
    %v1821 = vpack.c.b16 %v1809, %v1808
    %v1822 = vpack.c.b16 %v1811, %v1810
    %v1823 = vpack.c.b16 %v1813, %v1812
    %v1824 = vpack.c.b16 %v1815, %v1814
    %v1825 = vpack.c.b16 %v1817, %v1816
    %1834 = vmatprep.subr.bf16.mxu0 0
    %1835 = vmatpush1.bf16.msra.mxu0 %v1818
    %1836 = vmatprep.subr.bf16.mxu0 0
    %1837 = vmatpush1.bf16.msra.mxu0 %v1819
    %1838 = vmatprep.subr.bf16.mxu0 0
    %1839 = vmatpush1.bf16.msra.mxu0 %v1820
    %1840 = vmatprep.subr.bf16.mxu0 0
    %1841 = vmatpush1.bf16.msra.mxu0 %v1821
    %1842 = vmatprep.subr.bf16.mxu0 0
    %1843 = vmatpush1.bf16.msra.mxu0 %v1822
    %1844 = vmatprep.subr.bf16.mxu0 0
    %1845 = vmatpush1.bf16.msra.mxu0 %v1823
    %1846 = vmatprep.subr.bf16.mxu0 0
    %1847 = vmatpush1.bf16.msra.mxu0 %v1824
    %1848 = vmatprep.subr.bf16.mxu0 0
    %1849 = vmatpush1.bf16.msra.mxu0 %v1825
    %1850 = vmatprep.subr.bf16.mxu0 0
    %1851 = vmatpush1.bf16.msra.mxu0 0
    %1852 = vmatprep.subr.bf16.mxu0 0
    %1853 = vmatpush1.bf16.msra.mxu0 0
    %1854 = vmatprep.subr.bf16.mxu0 0
    %1855 = vmatpush1.bf16.msra.mxu0 0
    %1856 = vmatprep.subr.bf16.mxu0 0
    %1857 = vmatpush1.bf16.msra.mxu0 0
    %1858 = vmatprep.subr.bf16.mxu0 0
    %1859 = vmatpush1.bf16.msra.mxu0 0
    %1860 = vmatprep.subr.bf16.mxu0 0
    %1861 = vmatpush1.bf16.msra.mxu0 0
    %1862 = vmatprep.subr.bf16.mxu0 0
    %1863 = vmatpush1.bf16.msra.mxu0 0
    %1864 = vmatprep.subr.bf16.mxu0 0
    %1865 = vmatpush1.bf16.msra.mxu0 0
    %1866 = vmatprep.mubr.bf16.mxu0 0
    %1867 = vmatmul.mubr.bf16.gmra.mrb[0].mxu0 %v1785
    %v1868 = vpop.f32.mrb[0].mxu0
    %v1869 = vadd.f32 %v62, %v1868
    %v1870 = vpop.f32.mrb[0].mxu0
    %v1871 = vpop.f32.mrb[0].mxu0
    %v1872 = vadd.f32 %v62, %v1871
    %v1873 = vpop.f32.mrb[0].mxu0
    %1874 = vdwg.mxu0
    %v1875 = vadd.f32 %v1869, %v1767
    %v1876 = vadd.f32 %v1872, %v1768
    %v1877 = vmax.f32 %v1875, 0.0
    %v1878 = vmax.f32 %v1876, 0.0
    %1879 = vadd.xlane.f32.xlu0 %v1877
    %v1880 = vpop.xlane.xlu0 %1879
    %1881 = vadd.xlane.f32.xlu0 %v1878
    %v1882 = vpop.xlane.xlu0 %1881
    %v1883 = vrcp.pop 128.0
    %v1884 = vmul.f32 %v1880, %v1883
    %v1885 = vmul.f32 %v1882, %v1883
    %v1886 = vsub.f32 %v1877, %v1884
    %v1887 = vsub.f32 %v1878, %v1885
    %v1888 = vmul.f32 %v1886, %v1886
    %v1889 = vmul.f32 %v1887, %v1887
    %1890 = vadd.xlane.f32.xlu0 %v1888
    %v1891 = vpop.xlane.xlu0 %1890
    %1892 = vadd.xlane.f32.xlu0 %v1889
    %v1893 = vpop.xlane.xlu0 %1892
    %v1894 = vmul.f32 %v1891, %v1883
    %v1895 = vmul.f32 %v1893, %v1883
    %v1896 = vadd.f32 %v1894, 1e-05
    %v1897 = vadd.f32 %v1895, 1e-05
    %v1898 = vrsqrt.pop %v1896
    %v1899 = vrsqrt.pop %v1897
    %v1900 = vmul.f32 %v1886, %v1898
    %v1901 = vmul.f32 %v1887, %v1899
    %v1902 = vmul.f32 %v1900, %v63
    %v1903 = vmul.f32 %v1901, %v63
    %v1904 = vadd.f32 %v1902, %v64
    %v1905 = vadd.f32 %v1903, %v64
    %1906 = vst [vmem:[#allocation7] sm:$0xff] %v1904
    %1907 = vst [vmem:[#allocation7 + $0x8] sm:$0xff] %v1905
    // Predicated region
    $region34: #{forward.1} parent=1 // pred_check
      _
    $region35: #{forward.1} parent=1 // pred_check_branch
      %1909 = sbr.rel (0) target = $region37
    $region36: #{forward.1} parent=1 // pred_region
      %s1911 = ssub.s32 256, 256
      %1912 = vsyncadd [#allocation4], %s1911
      %s1913 = sshll.u32 [#allocation7], 4
      %s1914 = int_to_ptr.vmem [resolvable:$true] %s1913
      %1919 = dma.vmem_to_hbm [thread:$0]  %s1914, 256, %s6, [#allocation4], 128, 128, 8
    $region37: #{forward.1} parent=1 // pred_fallthru
      _
    // Predicated region
    $region38: #{forward.1} parent=1 // pred_check
      _
    $region39: #{forward.1} parent=1 // pred_check_branch
      %1921 = sbr.rel (0) target = $region41
    $region40: #{forward.1} parent=1 // pred_region
      %1922 = dma.done [#allocation4], 256
    $region41: #{forward.1} parent=1 // pred_fallthru
      _
    %1923 = vsyncpa [#allocation3], 1
    %1924 = vsyncpa [#allocation6], 1
    %1925 = vsyncpa [#allocation4], 1

</llo_original>
